<compile_context>
chip_gen: v5e
topology: v5e:2x2
jax: 0.10.0
libtpu: 0.0.40
codegen_flags: <defaults>
</compile_context>

<pallas_src>
import functools
from typing import NamedTuple

import jax
import jax.numpy as jnp
from jax import lax
from jax.experimental import pallas as pl
from jax.experimental.pallas import tpu as pltpu


# --------------------------- static layer config --------------------------- #

class LayerDim(NamedTuple):
    cin: int
    cout: int
    stride: int
    hin: int
    win: int
    oh: int
    ow: int
    mode: str          # "lrelu" | "inorm_lrelu" | "sigmoid"
    paired_in: bool    # input activation stored column-paired (stride-2 layers)


def _layer_dims(nb_features, H, W):
    F = nb_features
    specs = [
        (3, F, 2, "lrelu"),                # self.first
        (F, 2 * F, 2, "inorm_lrelu"),      # Block 1
        (2 * F, 4 * F, 2, "inorm_lrelu"),  # Block 2
        (4 * F, 6 * F, 1, "inorm_lrelu"),  # Block 3
        (6 * F, 1, 1, "sigmoid"),          # self.last
    ]
    dims = []
    h, w = H, W
    for cin, cout, stride, mode in specs:
        oh = (h + 2 - 4) // stride + 1
        ow = (w + 2 - 4) // stride + 1
        dims.append(LayerDim(cin, cout, stride, h, w, oh, ow, mode, stride == 2))
        h, w = oh, ow
    return tuple(dims)


# ------------------------------ kernel helpers ------------------------------ #

def _leaky_relu(y):
    return jnp.maximum(y, 0.2 * y)


def _instance_norm(y, m):
    # InstanceNorm2d(affine=False, eps=1e-5), one-pass biased statistics over
    # the spatial (sublane) axis: var = E[x^2] - mean^2.
    inv_m = 1.0 / float(m)
    mean = jnp.sum(y, axis=0, keepdims=True) * inv_m
    ex2 = jnp.sum(y * y, axis=0, keepdims=True) * inv_m
    var = ex2 - mean * mean
    return (y - mean) * lax.rsqrt(var + 1e-5)


def _write_pad_std(dst, y3, oh, ow):
    """dst: (oh+2, ow+2, C) ref; y3: (oh, ow, C).  ReflectionPad2d(1)."""
    dst[1:oh + 1, 1:ow + 1, :] = y3
    dst[1:oh + 1, 0:1, :] = y3[:, 1:2, :]                       # col 0 <- y col 1
    dst[1:oh + 1, ow + 1:ow + 2, :] = y3[:, ow - 2:ow - 1, :]   # col ow+1 <- y col ow-2
    dst[0:1, :, :] = dst[2:3, :, :]                             # row 0 <- y row 1
    dst[oh + 1:oh + 2, :, :] = dst[oh - 1:oh, :, :]             # row oh+1 <- y row oh-2


def _write_pad_paired(dst, y2, oh, ow, c):
    """Column-paired reflect-padded write.

    dst: (oh+2, (ow+2)//2, 2c) ref where dst[r, c', 0:c] = padded[r, 2c'] and
    dst[r, c', c:2c] = padded[r, 2c'+1].
    y2:  (oh, ow//2, 2c) value = GEMM output reshaped row-major, i.e.
         y2[i, j', 0:c] = y[i, 2j'] and y2[i, j', c:2c] = y[i, 2j'+1].
    """
    hw = ow // 2
    dst[1:oh + 1, 1:hw + 1, 0:c] = y2[:, :, c:2 * c]            # even padded cols 2..ow
    if hw > 1:
        dst[1:oh + 1, 1:hw, c:2 * c] = y2[:, 1:hw, 0:c]         # odd padded cols 3..ow-1
    dst[1:oh + 1, hw:hw + 1, c:2 * c] = y2[:, hw - 1:hw, 0:c]   # padded col ow+1 <- y col ow-2
    dst[1:oh + 1, 0:1, 0:c] = y2[:, 0:1, c:2 * c]               # padded col 0 <- y col 1
    dst[1:oh + 1, 0:1, c:2 * c] = y2[:, 0:1, 0:c]               # padded col 1 <- y col 0
    dst[0:1, :, :] = dst[2:3, :, :]                             # row reflect (top)
    dst[oh + 1:oh + 2, :, :] = dst[oh - 1:oh, :, :]             # row reflect (bottom)


def _build_im2col(src, imc, d):
    """Fill imc (oh, ow, 16*cin) bf16 with K ordered as (kh, kw, cin)."""
    oh, ow, cin = d.oh, d.ow, d.cin
    if d.stride == 2:
        # src is column-paired (hin+2, (win+2)//2, 2*cin): every tap-pair read
        # is contiguous on the sublane/lane dims; stride-2 only on the cheap
        # outermost row dim.
        for kh in range(4):
            rows = pl.ds(kh, oh, stride=2)
            for kwp in range(2):
                piece = src[rows, kwp:kwp + ow, :]               # (oh, ow, 2*cin)
                off = (4 * kh + 2 * kwp) * cin
                imc[:, :, off:off + 2 * cin] = piece.astype(imc.dtype)
    else:
        for kh in range(4):
            for kw in range(4):
                piece = src[kh:kh + oh, kw:kw + ow, :]           # (oh, ow, cin)
                off = (4 * kh + kw) * cin
                imc[:, :, off:off + cin] = piece.astype(imc.dtype)


# ------------------------------- fused kernel ------------------------------- #

def _fused_disc_kernel(x_ref, w0, b0, w1, b1, w2, b2, w3, b3, w4, b4, o_ref,
                       act1, act2, act3, act4,
                       imc0, imc1, imc2, imc3, imc4, *, dims):
    srcs = (x_ref, act1, act2, act3, act4)
    dsts = (act1, act2, act3, act4, None)
    imcs = (imc0, imc1, imc2, imc3, imc4)
    ws = (w0, w1, w2, w3, w4)
    bs = (b0, b1, b2, b3, b4)

    for li, d in enumerate(dims):
        oh, ow, cout = d.oh, d.ow, d.cout
        m, k = oh * ow, 16 * d.cin

        _build_im2col(srcs[li], imcs[li], d)
        patches = imcs[li][...].reshape(m, k)        # (M, K)  bf16, K lane-dense
        w = ws[li][...]                              # (cout, K) bf16
        b = bs[li][...]                              # (1, cout) f32

        if li + 1 < len(dims):
            # One MXU GEMM per layer: (M, K) x (cout, K)^T -> f32 (M, cout).
            y = lax.dot_general(patches, w, (((1,), (1,)), ((), ())),
                                preferred_element_type=jnp.float32) + b
            if d.mode == "inorm_lrelu":
                y = _instance_norm(y, m)
            y = _leaky_relu(y)

            nxt = dims[li + 1]
            dst = dsts[li]
            yb = y.astype(dst.dtype)
            if nxt.paired_in:
                # Row-major reshape pairs adjacent output columns -> exactly the
                # consumer's column-paired layout (no strided writes).
                _write_pad_paired(dst, yb.reshape(oh, ow // 2, 2 * cout), oh, ow, cout)
            else:
                _write_pad_std(dst, yb.reshape(oh, ow, cout), oh, ow)
        else:
            # Last layer (cout == 1): swap GEMM operands so the result is
            # already lane-dense (1, M) and maps straight onto the output block.
            logits = lax.dot_general(w, patches, (((1,), (1,)), ((), ())),
                                     preferred_element_type=jnp.float32) + b
            o_ref[...] = jax.nn.sigmoid(logits)


def fused_discriminator_forward(x, params):
    """x: (N, 3, H, W) float32; params: list of (w, b, stride, mode)."""
    N, C, H, W = x.shape
    F = params[0][0].shape[0]
    dims = _layer_dims(F, H, W)

    # Column pairing requires an even padded width for every stride-2 layer.
    for d in dims:
        if d.stride == 2 and (d.win + 2) % 2 != 0:
            raise ValueError("fused path requires even padded widths")

    # Input-side glue (done once, on the host): NCHW -> reflect-padded NHWC ->
    # column-paired (N, H+2, (W+2)//2, 2*C).  The final reshape is free.
    x_hwc = jnp.transpose(x.astype(jnp.float32), (0, 2, 3, 1))
    x_pad = jnp.pad(x_hwc, ((0, 0), (1, 1), (1, 1), (0, 0)), mode="reflect")
    x_paired = x_pad.reshape(N, H + 2, (W + 2) // 2, 2 * C)

    inputs = [x_paired]
    in_specs = [pl.BlockSpec((None, H + 2, (W + 2) // 2, 2 * C),
                             lambda n: (n, 0, 0, 0))]
    for (w, b, _, _), d in zip(params, dims):
        # (cout, cin, 4, 4) -> lane-dense (cout, 16*cin) bf16, K = (kh, kw, cin).
        w_mat = jnp.transpose(w.astype(jnp.float32), (0, 2, 3, 1)).reshape(
            d.cout, 16 * d.cin).astype(jnp.bfloat16)
        b_row = b.astype(jnp.float32).reshape(1, d.cout)
        inputs += [w_mat, b_row]
        in_specs += [
            pl.BlockSpec((d.cout, 16 * d.cin), lambda n: (0, 0)),
            pl.BlockSpec((1, d.cout), lambda n: (0, 0)),
        ]

    # Per-layer VMEM scratch: padded activations (bf16, column-paired when the
    # consumer has stride 2) + per-layer im2col tiles (bf16, K on lanes).
    scratch = []
    for li in range(1, len(dims)):
        d = dims[li]
        hp = d.hin + 2
        if d.paired_in:
            scratch.append(pltpu.VMEM((hp, (d.win + 2) // 2, 2 * d.cin),
                                      jnp.bfloat16))
        else:
            scratch.append(pltpu.VMEM((hp, d.win + 2, d.cin), jnp.bfloat16))
    for d in dims:
        scratch.append(pltpu.VMEM((d.oh, d.ow, 16 * d.cin), jnp.bfloat16))

    last = dims[-1]
    m_last = last.oh * last.ow
    out = pl.pallas_call(
        functools.partial(_fused_disc_kernel, dims=dims),
        out_shape=jax.ShapeDtypeStruct((N, 1, m_last), jnp.float32),
        grid_spec=pltpu.PrefetchScalarGridSpec(
            num_scalar_prefetch=0,
            grid=(N,),
            in_specs=in_specs,
            out_specs=pl.BlockSpec((None, 1, m_last), lambda n: (n, 0, 0)),
            scratch_shapes=scratch,
        ),
        compiler_params=pltpu.CompilerParams(
            dimension_semantics=("parallel",)),
    )(*inputs)
    return out.reshape(N, 1, last.oh, last.ow)


# ----------------- conservative per-layer fallback path -------------------- #
# Known-good lowering; only used if the fused single-call path fails.

def _layer_kernel(x_ref, w_ref, b_ref, o_ref, *, mode):
    x = x_ref[0]                                                   # (K, P)
    y = jnp.dot(w_ref[...], x, preferred_element_type=jnp.float32) + b_ref[...]
    if mode == "inorm_lrelu":
        mean = jnp.mean(y, axis=1, keepdims=True)
        var = jnp.mean((y - mean) * (y - mean), axis=1, keepdims=True)
        y = (y - mean) * lax.rsqrt(var + 1e-5)
        y = _leaky_relu(y)
    elif mode == "lrelu":
        y = _leaky_relu(y)
    else:
        y = jax.nn.sigmoid(y)
    o_ref[0] = y                                                   # (Cout, P)


def _im2col_reflect_kp(x, stride):
    N, C, H, W = x.shape
    xp = jnp.pad(x, ((0, 0), (0, 0), (1, 1), (1, 1)), mode="reflect")
    OH = (H + 2 - 4) // stride + 1
    OW = (W + 2 - 4) // stride + 1
    cols = []
    for i in range(4):
        for j in range(4):
            cols.append(xp[:, :, i:i + stride * OH:stride, j:j + stride * OW:stride])
    p = jnp.stack(cols, axis=2)                    # (N, C, 16, OH, OW)
    return p.reshape(N, C * 16, OH * OW), OH, OW


def layered_discriminator_forward(x, params):
    y = x.astype(jnp.float32)
    for (w, b, stride, mode) in params:
        cout = w.shape[0]
        patches, OH, OW = _im2col_reflect_kp(y, stride)
        N, K, P = patches.shape
        w_mat = w.astype(jnp.float32).reshape(cout, K)
        b_col = b.astype(jnp.float32).reshape(cout, 1)
        out = pl.pallas_call(
            functools.partial(_layer_kernel, mode=mode),
            out_shape=jax.ShapeDtypeStruct((N, cout, P), jnp.float32),
            grid_spec=pltpu.PrefetchScalarGridSpec(
                num_scalar_prefetch=0,
                grid=(N,),
                in_specs=[
                    pl.BlockSpec((1, K, P), lambda n: (n, 0, 0)),
                    pl.BlockSpec((cout, K), lambda n: (0, 0)),
                    pl.BlockSpec((cout, 1), lambda n: (0, 0)),
                ],
                out_specs=pl.BlockSpec((1, cout, P), lambda n: (n, 0, 0)),
            ),
            compiler_params=pltpu.CompilerParams(
                dimension_semantics=("parallel",)),
        )(patches, w_mat, b_col)
        y = out.reshape(N, cout, OH, OW)
    return y


# --------------------------- pure-XLA reference ----------------------------- #

def reference_forward(x, params):
    y = x.astype(jnp.float32)
    for (w, b, stride, mode) in params:
        yp = jnp.pad(y, ((0, 0), (0, 0), (1, 1), (1, 1)), mode="reflect")
        y = lax.conv_general_dilated(
            yp, w.astype(jnp.float32),
            window_strides=(stride, stride), padding="VALID",
            dimension_numbers=("NCHW", "OIHW", "NCHW"),
            precision=lax.Precision.HIGHEST)
        y = y + b.astype(jnp.float32).reshape(1, -1, 1, 1)
        if mode == "inorm_lrelu":
            m = jnp.mean(y, axis=(2, 3), keepdims=True)
            v = jnp.mean((y - m) ** 2, axis=(2, 3), keepdims=True)
            y = (y - m) * lax.rsqrt(v + 1e-5)
            y = jnp.where(y >= 0, y, 0.2 * y)
        elif mode == "lrelu":
            y = jnp.where(y >= 0, y, 0.2 * y)
        else:
            y = jax.nn.sigmoid(y)
    return y


# ----------------------------- parameter init ------------------------------- #

def init_params(nb_features, key):
    F = nb_features
    specs = [
        (3, F, 2, "lrelu"),
        (F, 2 * F, 2, "inorm_lrelu"),
        (2 * F, 4 * F, 2, "inorm_lrelu"),
        (4 * F, 6 * F, 1, "inorm_lrelu"),
        (6 * F, 1, 1, "sigmoid"),
    ]
    params = []
    for li, (cin, cout, stride, mode) in enumerate(specs):
        kw_, kb_ = jax.random.split(jax.random.fold_in(key, li))
        w = 0.05 * jax.random.normal(kw_, (cout, cin, 4, 4), dtype=jnp.float32)
        b = 0.05 * jax.random.normal(kb_, (cout,), dtype=jnp.float32)
        params.append((w, b, stride, mode))
    return params


# ---------------------------------- main ------------------------------------ #

if __name__ == "__main__":
    key = jax.random.PRNGKey(0)
    k_in, k_par = jax.random.split(key)

    nb_features = 8
    N, Cin, H, W = 2, 3, 32, 32
    x = jax.random.normal(k_in, (N, Cin, H, W), dtype=jnp.float32)
    params = init_params(nb_features, k_par)

    ref = jax.block_until_ready(reference_forward(x, params))

    def _verify(out, atol):
        # Expected PatchGAN output for 32x32 input: (N, 1, 2, 2), values in (0, 1).
        assert out.shape == (N, 1, 2, 2), out.shape
        assert bool(jnp.all(jnp.isfinite(out)))
        assert bool(jnp.all((out > 0.0) & (out < 1.0)))
        assert bool(jnp.allclose(out, ref, atol=atol, rtol=0.0)), \
            float(jnp.max(jnp.abs(out - ref)))

    out = None
    try:
        out = jax.block_until_ready(fused_discriminator_forward(x, params))
        # bf16 MXU operands vs. Precision.HIGHEST f32 reference -> slightly
        # looser tolerance than the f32 fallback.
        _verify(out, atol=2e-2)
    except Exception:  # conservative guard: fall back if the fused path is unavailable
        out = None
    if out is None:
        out = jax.block_until_ready(layered_discriminator_forward(x, params))
        _verify(out, atol=5e-3)

    print("KERNEL_OK")
</pallas_src>

<mosaic_0001>
module attributes {stable_mosaic.version = 11 : i64} {
  func.func @_fused_disc_kernel(%arg0: i32, %arg1: memref<1x34x17x6xf32, #tpu.memory_space<vmem>>, %arg2: memref<8x48xbf16, #tpu.memory_space<vmem>>, %arg3: memref<1x8xf32, #tpu.memory_space<vmem>>, %arg4: memref<16x128xbf16, #tpu.memory_space<vmem>>, %arg5: memref<1x16xf32, #tpu.memory_space<vmem>>, %arg6: memref<32x256xbf16, #tpu.memory_space<vmem>>, %arg7: memref<1x32xf32, #tpu.memory_space<vmem>>, %arg8: memref<48x512xbf16, #tpu.memory_space<vmem>>, %arg9: memref<1x48xf32, #tpu.memory_space<vmem>>, %arg10: memref<1x768xbf16, #tpu.memory_space<vmem>>, %arg11: memref<1x1xf32, #tpu.memory_space<vmem>>, %arg12: memref<1x1x4xf32, #tpu.memory_space<vmem>>, %arg13: memref<18x9x16xbf16, #tpu.memory_space<vmem>>, %arg14: memref<10x5x32xbf16, #tpu.memory_space<vmem>>, %arg15: memref<6x6x32xbf16, #tpu.memory_space<vmem>>, %arg16: memref<5x5x48xbf16, #tpu.memory_space<vmem>>, %arg17: memref<16x16x48xbf16, #tpu.memory_space<vmem>>, %arg18: memref<8x8x128xbf16, #tpu.memory_space<vmem>>, %arg19: memref<4x4x256xbf16, #tpu.memory_space<vmem>>, %arg20: memref<3x3x512xbf16, #tpu.memory_space<vmem>>, %arg21: memref<2x2x768xbf16, #tpu.memory_space<vmem>>) attributes {dimension_semantics = [#tpu.dimension_semantics<parallel>], iteration_bounds = array<i64: 2>, scalar_prefetch = 0 : i64, scratch_operands = 9 : i64, tpu.core_type = #tpu.core_type<tc>, window_params = [{transform_indices = @transform_0, window_bounds = array<i64: 1, 34, 17, 6>}, {pipeline_mode = #tpu.pipeline_mode<synchronous>, transform_indices = @transform_1, window_bounds = array<i64: 8, 48>}, {pipeline_mode = #tpu.pipeline_mode<synchronous>, transform_indices = @transform_2, window_bounds = array<i64: 1, 8>}, {pipeline_mode = #tpu.pipeline_mode<synchronous>, transform_indices = @transform_3, window_bounds = array<i64: 16, 128>}, {pipeline_mode = #tpu.pipeline_mode<synchronous>, transform_indices = @transform_4, window_bounds = array<i64: 1, 16>}, {pipeline_mode = #tpu.pipeline_mode<synchronous>, transform_indices = @transform_5, window_bounds = array<i64: 32, 256>}, {pipeline_mode = #tpu.pipeline_mode<synchronous>, transform_indices = @transform_6, window_bounds = array<i64: 1, 32>}, {pipeline_mode = #tpu.pipeline_mode<synchronous>, transform_indices = @transform_7, window_bounds = array<i64: 48, 512>}, {pipeline_mode = #tpu.pipeline_mode<synchronous>, transform_indices = @transform_8, window_bounds = array<i64: 1, 48>}, {pipeline_mode = #tpu.pipeline_mode<synchronous>, transform_indices = @transform_9, window_bounds = array<i64: 1, 768>}, {pipeline_mode = #tpu.pipeline_mode<synchronous>, transform_indices = @transform_10, window_bounds = array<i64: 1, 1>}, {transform_indices = @transform_11, window_bounds = array<i64: 1, 1, 4>}]} {
    %c0 = arith.constant 0 : index
    %c0_0 = arith.constant 0 : index
    %c0_1 = arith.constant 0 : index
    %c0_2 = arith.constant 0 : index
    %0 = tpu.strided_load %arg1[%c0, %c0_0, %c0_1, %c0_2] {strides = array<i32: 1, 2, 1, 1>} : memref<1x34x17x6xf32, #tpu.memory_space<vmem>>, vector<1x16x16x6xf32>
    %1 = vector.shape_cast %0 : vector<1x16x16x6xf32> to vector<16x16x6xf32>
    %2 = arith.truncf %1 : vector<16x16x6xf32> to vector<16x16x6xbf16>
    %c0_3 = arith.constant 0 : index
    %c0_4 = arith.constant 0 : index
    %c0_5 = arith.constant 0 : index
    %3 = vector.load %arg17[%c0_3, %c0_4, %c0_5] : memref<16x16x48xbf16, #tpu.memory_space<vmem>>, vector<16x16x6xbf16>
    tpu.vector_store %arg17[%c0_3, %c0_4, %c0_5], %2 {strides = array<i32>} : memref<16x16x48xbf16, #tpu.memory_space<vmem>>, vector<16x16x6xbf16>,
    %c0_6 = arith.constant 0 : index
    %c0_7 = arith.constant 0 : index
    %c1 = arith.constant 1 : index
    %c0_8 = arith.constant 0 : index
    %4 = tpu.strided_load %arg1[%c0_6, %c0_7, %c1, %c0_8] {strides = array<i32: 1, 2, 1, 1>} : memref<1x34x17x6xf32, #tpu.memory_space<vmem>>, vector<1x16x16x6xf32>
    %5 = vector.shape_cast %4 : vector<1x16x16x6xf32> to vector<16x16x6xf32>
    %6 = arith.truncf %5 : vector<16x16x6xf32> to vector<16x16x6xbf16>
    %c0_9 = arith.constant 0 : index
    %c0_10 = arith.constant 0 : index
    %c6 = arith.constant 6 : index
    %7 = vector.load %arg17[%c0_9, %c0_10, %c6] : memref<16x16x48xbf16, #tpu.memory_space<vmem>>, vector<16x16x6xbf16>
    tpu.vector_store %arg17[%c0_9, %c0_10, %c6], %6 {strides = array<i32>} : memref<16x16x48xbf16, #tpu.memory_space<vmem>>, vector<16x16x6xbf16>,
    %c0_11 = arith.constant 0 : index
    %c1_12 = arith.constant 1 : index
    %c0_13 = arith.constant 0 : index
    %c0_14 = arith.constant 0 : index
    %8 = tpu.strided_load %arg1[%c0_11, %c1_12, %c0_13, %c0_14] {strides = array<i32: 1, 2, 1, 1>} : memref<1x34x17x6xf32, #tpu.memory_space<vmem>>, vector<1x16x16x6xf32>
    %9 = vector.shape_cast %8 : vector<1x16x16x6xf32> to vector<16x16x6xf32>
    %10 = arith.truncf %9 : vector<16x16x6xf32> to vector<16x16x6xbf16>
    %c0_15 = arith.constant 0 : index
    %c0_16 = arith.constant 0 : index
    %c12 = arith.constant 12 : index
    %11 = vector.load %arg17[%c0_15, %c0_16, %c12] : memref<16x16x48xbf16, #tpu.memory_space<vmem>>, vector<16x16x6xbf16>
    tpu.vector_store %arg17[%c0_15, %c0_16, %c12], %10 {strides = array<i32>} : memref<16x16x48xbf16, #tpu.memory_space<vmem>>, vector<16x16x6xbf16>,
    %c0_17 = arith.constant 0 : index
    %c1_18 = arith.constant 1 : index
    %c1_19 = arith.constant 1 : index
    %c0_20 = arith.constant 0 : index
    %12 = tpu.strided_load %arg1[%c0_17, %c1_18, %c1_19, %c0_20] {strides = array<i32: 1, 2, 1, 1>} : memref<1x34x17x6xf32, #tpu.memory_space<vmem>>, vector<1x16x16x6xf32>
    %13 = vector.shape_cast %12 : vector<1x16x16x6xf32> to vector<16x16x6xf32>
    %14 = arith.truncf %13 : vector<16x16x6xf32> to vector<16x16x6xbf16>
    %c0_21 = arith.constant 0 : index
    %c0_22 = arith.constant 0 : index
    %c18 = arith.constant 18 : index
    %15 = vector.load %arg17[%c0_21, %c0_22, %c18] : memref<16x16x48xbf16, #tpu.memory_space<vmem>>, vector<16x16x6xbf16>
    tpu.vector_store %arg17[%c0_21, %c0_22, %c18], %14 {strides = array<i32>} : memref<16x16x48xbf16, #tpu.memory_space<vmem>>, vector<16x16x6xbf16>,
    %c0_23 = arith.constant 0 : index
    %c2 = arith.constant 2 : index
    %c0_24 = arith.constant 0 : index
    %c0_25 = arith.constant 0 : index
    %16 = tpu.strided_load %arg1[%c0_23, %c2, %c0_24, %c0_25] {strides = array<i32: 1, 2, 1, 1>} : memref<1x34x17x6xf32, #tpu.memory_space<vmem>>, vector<1x16x16x6xf32>
    %17 = vector.shape_cast %16 : vector<1x16x16x6xf32> to vector<16x16x6xf32>
    %18 = arith.truncf %17 : vector<16x16x6xf32> to vector<16x16x6xbf16>
    %c0_26 = arith.constant 0 : index
    %c0_27 = arith.constant 0 : index
    %c24 = arith.constant 24 : index
    %19 = vector.load %arg17[%c0_26, %c0_27, %c24] : memref<16x16x48xbf16, #tpu.memory_space<vmem>>, vector<16x16x6xbf16>
    tpu.vector_store %arg17[%c0_26, %c0_27, %c24], %18 {strides = array<i32>} : memref<16x16x48xbf16, #tpu.memory_space<vmem>>, vector<16x16x6xbf16>,
    %c0_28 = arith.constant 0 : index
    %c2_29 = arith.constant 2 : index
    %c1_30 = arith.constant 1 : index
    %c0_31 = arith.constant 0 : index
    %20 = tpu.strided_load %arg1[%c0_28, %c2_29, %c1_30, %c0_31] {strides = array<i32: 1, 2, 1, 1>} : memref<1x34x17x6xf32, #tpu.memory_space<vmem>>, vector<1x16x16x6xf32>
    %21 = vector.shape_cast %20 : vector<1x16x16x6xf32> to vector<16x16x6xf32>
    %22 = arith.truncf %21 : vector<16x16x6xf32> to vector<16x16x6xbf16>
    %c0_32 = arith.constant 0 : index
    %c0_33 = arith.constant 0 : index
    %c30 = arith.constant 30 : index
    %23 = vector.load %arg17[%c0_32, %c0_33, %c30] : memref<16x16x48xbf16, #tpu.memory_space<vmem>>, vector<16x16x6xbf16>
    tpu.vector_store %arg17[%c0_32, %c0_33, %c30], %22 {strides = array<i32>} : memref<16x16x48xbf16, #tpu.memory_space<vmem>>, vector<16x16x6xbf16>,
    %c0_34 = arith.constant 0 : index
    %c3 = arith.constant 3 : index
    %c0_35 = arith.constant 0 : index
    %c0_36 = arith.constant 0 : index
    %24 = tpu.strided_load %arg1[%c0_34, %c3, %c0_35, %c0_36] {strides = array<i32: 1, 2, 1, 1>} : memref<1x34x17x6xf32, #tpu.memory_space<vmem>>, vector<1x16x16x6xf32>
    %25 = vector.shape_cast %24 : vector<1x16x16x6xf32> to vector<16x16x6xf32>
    %26 = arith.truncf %25 : vector<16x16x6xf32> to vector<16x16x6xbf16>
    %c0_37 = arith.constant 0 : index
    %c0_38 = arith.constant 0 : index
    %c36 = arith.constant 36 : index
    %27 = vector.load %arg17[%c0_37, %c0_38, %c36] : memref<16x16x48xbf16, #tpu.memory_space<vmem>>, vector<16x16x6xbf16>
    tpu.vector_store %arg17[%c0_37, %c0_38, %c36], %26 {strides = array<i32>} : memref<16x16x48xbf16, #tpu.memory_space<vmem>>, vector<16x16x6xbf16>,
    %c0_39 = arith.constant 0 : index
    %c3_40 = arith.constant 3 : index
    %c1_41 = arith.constant 1 : index
    %c0_42 = arith.constant 0 : index
    %28 = tpu.strided_load %arg1[%c0_39, %c3_40, %c1_41, %c0_42] {strides = array<i32: 1, 2, 1, 1>} : memref<1x34x17x6xf32, #tpu.memory_space<vmem>>, vector<1x16x16x6xf32>
    %29 = vector.shape_cast %28 : vector<1x16x16x6xf32> to vector<16x16x6xf32>
    %30 = arith.truncf %29 : vector<16x16x6xf32> to vector<16x16x6xbf16>
    %c0_43 = arith.constant 0 : index
    %c0_44 = arith.constant 0 : index
    %c42 = arith.constant 42 : index
    %31 = vector.load %arg17[%c0_43, %c0_44, %c42] : memref<16x16x48xbf16, #tpu.memory_space<vmem>>, vector<16x16x6xbf16>
    tpu.vector_store %arg17[%c0_43, %c0_44, %c42], %30 {strides = array<i32>} : memref<16x16x48xbf16, #tpu.memory_space<vmem>>, vector<16x16x6xbf16>,
    %c0_45 = arith.constant 0 : index
    %c0_46 = arith.constant 0 : index
    %c0_47 = arith.constant 0 : index
    %32 = vector.load %arg17[%c0_45, %c0_46, %c0_47] : memref<16x16x48xbf16, #tpu.memory_space<vmem>>, vector<16x16x48xbf16>
    %33 = vector.shape_cast %32 : vector<16x16x48xbf16> to vector<256x48xbf16>
    %c0_48 = arith.constant 0 : index
    %c0_49 = arith.constant 0 : index
    %34 = vector.load %arg2[%c0_48, %c0_49] : memref<8x48xbf16, #tpu.memory_space<vmem>>, vector<8x48xbf16>
    %c0_50 = arith.constant 0 : index
    %c0_51 = arith.constant 0 : index
    %35 = vector.load %arg3[%c0_50, %c0_51] : memref<1x8xf32, #tpu.memory_space<vmem>>, vector<1x8xf32>
    %cst = arith.constant dense<0.000000e+00> : vector<256x8xf32>
    %36 = tpu.matmul %33, %34, %cst {dimension_numbers = #tpu.dot_dimension_numbers<[1], [1], [0], [0], [0, 0, 1, 0], [], []>} : vector<256x48xbf16>, vector<8x48xbf16>, vector<256x8xf32> -> vector<256x8xf32>
    %37 = vector.broadcast %35 : vector<1x8xf32> to vector<256x8xf32>
    %38 = arith.addf %36, %37 : vector<256x8xf32>
    %cst_52 = arith.constant 2.000000e-01 : f32
    %39 = vector.broadcast %cst_52 : f32 to vector<256x8xf32>
    %40 = arith.mulf %39, %38 : vector<256x8xf32>
    %41 = arith.maximumf %38, %40 : vector<256x8xf32>
    %42 = arith.truncf %41 : vector<256x8xf32> to vector<256x8xbf16>
    %43 = vector.shape_cast %42 : vector<256x8xbf16> to vector<16x8x16xbf16>
    %44 = vector.extract_strided_slice %43 {offsets = [0, 0, 8], sizes = [16, 8, 8], strides = [1, 1, 1]} : vector<16x8x16xbf16> to vector<16x8x8xbf16>
    %c1_53 = arith.constant 1 : index
    %c1_54 = arith.constant 1 : index
    %c0_55 = arith.constant 0 : index
    %45 = vector.load %arg13[%c1_53, %c1_54, %c0_55] : memref<18x9x16xbf16, #tpu.memory_space<vmem>>, vector<16x8x8xbf16>
    tpu.vector_store %arg13[%c1_53, %c1_54, %c0_55], %44 {strides = array<i32>} : memref<18x9x16xbf16, #tpu.memory_space<vmem>>, vector<16x8x8xbf16>,
    %46 = vector.extract_strided_slice %43 {offsets = [0, 1, 0], sizes = [16, 7, 8], strides = [1, 1, 1]} : vector<16x8x16xbf16> to vector<16x7x8xbf16>
    %c1_56 = arith.constant 1 : index
    %c1_57 = arith.constant 1 : index
    %c8 = arith.constant 8 : index
    %47 = vector.load %arg13[%c1_56, %c1_57, %c8] : memref<18x9x16xbf16, #tpu.memory_space<vmem>>, vector<16x7x8xbf16>
    tpu.vector_store %arg13[%c1_56, %c1_57, %c8], %46 {strides = array<i32>} : memref<18x9x16xbf16, #tpu.memory_space<vmem>>, vector<16x7x8xbf16>,
    %48 = vector.extract_strided_slice %43 {offsets = [0, 7, 0], sizes = [16, 1, 8], strides = [1, 1, 1]} : vector<16x8x16xbf16> to vector<16x1x8xbf16>
    %c1_58 = arith.constant 1 : index
    %c8_59 = arith.constant 8 : index
    %c8_60 = arith.constant 8 : index
    %49 = vector.load %arg13[%c1_58, %c8_59, %c8_60] : memref<18x9x16xbf16, #tpu.memory_space<vmem>>, vector<16x1x8xbf16>
    tpu.vector_store %arg13[%c1_58, %c8_59, %c8_60], %48 {strides = array<i32>} : memref<18x9x16xbf16, #tpu.memory_space<vmem>>, vector<16x1x8xbf16>,
    %50 = vector.extract_strided_slice %43 {offsets = [0, 0, 8], sizes = [16, 1, 8], strides = [1, 1, 1]} : vector<16x8x16xbf16> to vector<16x1x8xbf16>
    %c1_61 = arith.constant 1 : index
    %c0_62 = arith.constant 0 : index
    %c0_63 = arith.constant 0 : index
    %51 = vector.load %arg13[%c1_61, %c0_62, %c0_63] : memref<18x9x16xbf16, #tpu.memory_space<vmem>>, vector<16x1x8xbf16>
    tpu.vector_store %arg13[%c1_61, %c0_62, %c0_63], %50 {strides = array<i32>} : memref<18x9x16xbf16, #tpu.memory_space<vmem>>, vector<16x1x8xbf16>,
    %52 = vector.extract_strided_slice %43 {offsets = [0, 0, 0], sizes = [16, 1, 8], strides = [1, 1, 1]} : vector<16x8x16xbf16> to vector<16x1x8xbf16>
    %c1_64 = arith.constant 1 : index
    %c0_65 = arith.constant 0 : index
    %c8_66 = arith.constant 8 : index
    %53 = vector.load %arg13[%c1_64, %c0_65, %c8_66] : memref<18x9x16xbf16, #tpu.memory_space<vmem>>, vector<16x1x8xbf16>
    tpu.vector_store %arg13[%c1_64, %c0_65, %c8_66], %52 {strides = array<i32>} : memref<18x9x16xbf16, #tpu.memory_space<vmem>>, vector<16x1x8xbf16>,
    %c2_67 = arith.constant 2 : index
    %c0_68 = arith.constant 0 : index
    %c0_69 = arith.constant 0 : index
    %54 = vector.load %arg13[%c2_67, %c0_68, %c0_69] : memref<18x9x16xbf16, #tpu.memory_space<vmem>>, vector<1x9x16xbf16>
    %c0_70 = arith.constant 0 : index
    %c0_71 = arith.constant 0 : index
    %c0_72 = arith.constant 0 : index
    %55 = vector.load %arg13[%c0_70, %c0_71, %c0_72] : memref<18x9x16xbf16, #tpu.memory_space<vmem>>, vector<1x9x16xbf16>
    tpu.vector_store %arg13[%c0_70, %c0_71, %c0_72], %54 {strides = array<i32>} : memref<18x9x16xbf16, #tpu.memory_space<vmem>>, vector<1x9x16xbf16>,
    %c15 = arith.constant 15 : index
    %c0_73 = arith.constant 0 : index
    %c0_74 = arith.constant 0 : index
    %56 = vector.load %arg13[%c15, %c0_73, %c0_74] : memref<18x9x16xbf16, #tpu.memory_space<vmem>>, vector<1x9x16xbf16>
    %c17 = arith.constant 17 : index
    %c0_75 = arith.constant 0 : index
    %c0_76 = arith.constant 0 : index
    %57 = vector.load %arg13[%c17, %c0_75, %c0_76] : memref<18x9x16xbf16, #tpu.memory_space<vmem>>, vector<1x9x16xbf16>
    tpu.vector_store %arg13[%c17, %c0_75, %c0_76], %56 {strides = array<i32>} : memref<18x9x16xbf16, #tpu.memory_space<vmem>>, vector<1x9x16xbf16>,
    %c0_77 = arith.constant 0 : index
    %c0_78 = arith.constant 0 : index
    %c0_79 = arith.constant 0 : index
    %58 = tpu.strided_load %arg13[%c0_77, %c0_78, %c0_79] {strides = array<i32: 2, 1, 1>} : memref<18x9x16xbf16, #tpu.memory_space<vmem>>, vector<8x8x16xbf16>
    %c0_80 = arith.constant 0 : index
    %c0_81 = arith.constant 0 : index
    %c0_82 = arith.constant 0 : index
    %59 = vector.load %arg18[%c0_80, %c0_81, %c0_82] : memref<8x8x128xbf16, #tpu.memory_space<vmem>>, vector<8x8x16xbf16>
    tpu.vector_store %arg18[%c0_80, %c0_81, %c0_82], %58 {strides = array<i32>} : memref<8x8x128xbf16, #tpu.memory_space<vmem>>, vector<8x8x16xbf16>,
    %c0_83 = arith.constant 0 : index
    %c1_84 = arith.constant 1 : index
    %c0_85 = arith.constant 0 : index
    %60 = tpu.strided_load %arg13[%c0_83, %c1_84, %c0_85] {strides = array<i32: 2, 1, 1>} : memref<18x9x16xbf16, #tpu.memory_space<vmem>>, vector<8x8x16xbf16>
    %c0_86 = arith.constant 0 : index
    %c0_87 = arith.constant 0 : index
    %c16 = arith.constant 16 : index
    %61 = vector.load %arg18[%c0_86, %c0_87, %c16] : memref<8x8x128xbf16, #tpu.memory_space<vmem>>, vector<8x8x16xbf16>
    tpu.vector_store %arg18[%c0_86, %c0_87, %c16], %60 {strides = array<i32>} : memref<8x8x128xbf16, #tpu.memory_space<vmem>>, vector<8x8x16xbf16>,
    %c1_88 = arith.constant 1 : index
    %c0_89 = arith.constant 0 : index
    %c0_90 = arith.constant 0 : index
    %62 = tpu.strided_load %arg13[%c1_88, %c0_89, %c0_90] {strides = array<i32: 2, 1, 1>} : memref<18x9x16xbf16, #tpu.memory_space<vmem>>, vector<8x8x16xbf16>
    %c0_91 = arith.constant 0 : index
    %c0_92 = arith.constant 0 : index
    %c32 = arith.constant 32 : index
    %63 = vector.load %arg18[%c0_91, %c0_92, %c32] : memref<8x8x128xbf16, #tpu.memory_space<vmem>>, vector<8x8x16xbf16>
    tpu.vector_store %arg18[%c0_91, %c0_92, %c32], %62 {strides = array<i32>} : memref<8x8x128xbf16, #tpu.memory_space<vmem>>, vector<8x8x16xbf16>,
    %c1_93 = arith.constant 1 : index
    %c1_94 = arith.constant 1 : index
    %c0_95 = arith.constant 0 : index
    %64 = tpu.strided_load %arg13[%c1_93, %c1_94, %c0_95] {strides = array<i32: 2, 1, 1>} : memref<18x9x16xbf16, #tpu.memory_space<vmem>>, vector<8x8x16xbf16>
    %c0_96 = arith.constant 0 : index
    %c0_97 = arith.constant 0 : index
    %c48 = arith.constant 48 : index
    %65 = vector.load %arg18[%c0_96, %c0_97, %c48] : memref<8x8x128xbf16, #tpu.memory_space<vmem>>, vector<8x8x16xbf16>
    tpu.vector_store %arg18[%c0_96, %c0_97, %c48], %64 {strides = array<i32>} : memref<8x8x128xbf16, #tpu.memory_space<vmem>>, vector<8x8x16xbf16>,
    %c2_98 = arith.constant 2 : index
    %c0_99 = arith.constant 0 : index
    %c0_100 = arith.constant 0 : index
    %66 = tpu.strided_load %arg13[%c2_98, %c0_99, %c0_100] {strides = array<i32: 2, 1, 1>} : memref<18x9x16xbf16, #tpu.memory_space<vmem>>, vector<8x8x16xbf16>
    %c0_101 = arith.constant 0 : index
    %c0_102 = arith.constant 0 : index
    %c64 = arith.constant 64 : index
    %67 = vector.load %arg18[%c0_101, %c0_102, %c64] : memref<8x8x128xbf16, #tpu.memory_space<vmem>>, vector<8x8x16xbf16>
    tpu.vector_store %arg18[%c0_101, %c0_102, %c64], %66 {strides = array<i32>} : memref<8x8x128xbf16, #tpu.memory_space<vmem>>, vector<8x8x16xbf16>,
    %c2_103 = arith.constant 2 : index
    %c1_104 = arith.constant 1 : index
    %c0_105 = arith.constant 0 : index
    %68 = tpu.strided_load %arg13[%c2_103, %c1_104, %c0_105] {strides = array<i32: 2, 1, 1>} : memref<18x9x16xbf16, #tpu.memory_space<vmem>>, vector<8x8x16xbf16>
    %c0_106 = arith.constant 0 : index
    %c0_107 = arith.constant 0 : index
    %c80 = arith.constant 80 : index
    %69 = vector.load %arg18[%c0_106, %c0_107, %c80] : memref<8x8x128xbf16, #tpu.memory_space<vmem>>, vector<8x8x16xbf16>
    tpu.vector_store %arg18[%c0_106, %c0_107, %c80], %68 {strides = array<i32>} : memref<8x8x128xbf16, #tpu.memory_space<vmem>>, vector<8x8x16xbf16>,
    %c3_108 = arith.constant 3 : index
    %c0_109 = arith.constant 0 : index
    %c0_110 = arith.constant 0 : index
    %70 = tpu.strided_load %arg13[%c3_108, %c0_109, %c0_110] {strides = array<i32: 2, 1, 1>} : memref<18x9x16xbf16, #tpu.memory_space<vmem>>, vector<8x8x16xbf16>
    %c0_111 = arith.constant 0 : index
    %c0_112 = arith.constant 0 : index
    %c96 = arith.constant 96 : index
    %71 = vector.load %arg18[%c0_111, %c0_112, %c96] : memref<8x8x128xbf16, #tpu.memory_space<vmem>>, vector<8x8x16xbf16>
    tpu.vector_store %arg18[%c0_111, %c0_112, %c96], %70 {strides = array<i32>} : memref<8x8x128xbf16, #tpu.memory_space<vmem>>, vector<8x8x16xbf16>,
    %c3_113 = arith.constant 3 : index
    %c1_114 = arith.constant 1 : index
    %c0_115 = arith.constant 0 : index
    %72 = tpu.strided_load %arg13[%c3_113, %c1_114, %c0_115] {strides = array<i32: 2, 1, 1>} : memref<18x9x16xbf16, #tpu.memory_space<vmem>>, vector<8x8x16xbf16>
    %c0_116 = arith.constant 0 : index
    %c0_117 = arith.constant 0 : index
    %c112 = arith.constant 112 : index
    %73 = vector.load %arg18[%c0_116, %c0_117, %c112] : memref<8x8x128xbf16, #tpu.memory_space<vmem>>, vector<8x8x16xbf16>
    tpu.vector_store %arg18[%c0_116, %c0_117, %c112], %72 {strides = array<i32>} : memref<8x8x128xbf16, #tpu.memory_space<vmem>>, vector<8x8x16xbf16>,
    %c0_118 = arith.constant 0 : index
    %c0_119 = arith.constant 0 : index
    %c0_120 = arith.constant 0 : index
    %74 = vector.load %arg18[%c0_118, %c0_119, %c0_120] : memref<8x8x128xbf16, #tpu.memory_space<vmem>>, vector<8x8x128xbf16>
    %75 = vector.shape_cast %74 : vector<8x8x128xbf16> to vector<64x128xbf16>
    %c0_121 = arith.constant 0 : index
    %c0_122 = arith.constant 0 : index
    %76 = vector.load %arg4[%c0_121, %c0_122] : memref<16x128xbf16, #tpu.memory_space<vmem>>, vector<16x128xbf16>
    %c0_123 = arith.constant 0 : index
    %c0_124 = arith.constant 0 : index
    %77 = vector.load %arg5[%c0_123, %c0_124] : memref<1x16xf32, #tpu.memory_space<vmem>>, vector<1x16xf32>
    %cst_125 = arith.constant dense<0.000000e+00> : vector<64x16xf32>
    %78 = tpu.matmul %75, %76, %cst_125 {dimension_numbers = #tpu.dot_dimension_numbers<[1], [1], [0], [0], [0, 0, 1, 0], [], []>} : vector<64x128xbf16>, vector<16x128xbf16>, vector<64x16xf32> -> vector<64x16xf32>
    %79 = vector.broadcast %77 : vector<1x16xf32> to vector<64x16xf32>
    %80 = arith.addf %78, %79 : vector<64x16xf32>
    %cst_126 = arith.constant dense<0.000000e+00> : vector<16xf32>
    %81 = vector.multi_reduction <add>, %80, %cst_126 [0] : vector<64x16xf32> to vector<16xf32>
    %82 = vector.shape_cast %81 : vector<16xf32> to vector<1x16xf32>
    %cst_127 = arith.constant 1.562500e-02 : f32
    %83 = vector.broadcast %cst_127 : f32 to vector<1x16xf32>
    %84 = arith.mulf %82, %83 : vector<1x16xf32>
    %85 = arith.mulf %80, %80 : vector<64x16xf32>
    %cst_128 = arith.constant dense<0.000000e+00> : vector<16xf32>
    %86 = vector.multi_reduction <add>, %85, %cst_128 [0] : vector<64x16xf32> to vector<16xf32>
    %87 = vector.shape_cast %86 : vector<16xf32> to vector<1x16xf32>
    %cst_129 = arith.constant 1.562500e-02 : f32
    %88 = vector.broadcast %cst_129 : f32 to vector<1x16xf32>
    %89 = arith.mulf %87, %88 : vector<1x16xf32>
    %90 = arith.mulf %84, %84 : vector<1x16xf32>
    %91 = arith.subf %89, %90 : vector<1x16xf32>
    %92 = vector.broadcast %84 : vector<1x16xf32> to vector<64x16xf32>
    %93 = arith.subf %80, %92 : vector<64x16xf32>
    %cst_130 = arith.constant 9.99999974E-6 : f32
    %94 = vector.broadcast %cst_130 : f32 to vector<1x16xf32>
    %95 = arith.addf %91, %94 : vector<1x16xf32>
    %96 = math.rsqrt %95 : vector<1x16xf32>
    %97 = vector.broadcast %96 : vector<1x16xf32> to vector<64x16xf32>
    %98 = arith.mulf %93, %97 : vector<64x16xf32>
    %cst_131 = arith.constant 2.000000e-01 : f32
    %99 = vector.broadcast %cst_131 : f32 to vector<64x16xf32>
    %100 = arith.mulf %99, %98 : vector<64x16xf32>
    %101 = arith.maximumf %98, %100 : vector<64x16xf32>
    %102 = arith.truncf %101 : vector<64x16xf32> to vector<64x16xbf16>
    %103 = vector.shape_cast %102 : vector<64x16xbf16> to vector<8x4x32xbf16>
    %104 = vector.extract_strided_slice %103 {offsets = [0, 0, 16], sizes = [8, 4, 16], strides = [1, 1, 1]} : vector<8x4x32xbf16> to vector<8x4x16xbf16>
    %c1_132 = arith.constant 1 : index
    %c1_133 = arith.constant 1 : index
    %c0_134 = arith.constant 0 : index
    %105 = vector.load %arg14[%c1_132, %c1_133, %c0_134] : memref<10x5x32xbf16, #tpu.memory_space<vmem>>, vector<8x4x16xbf16>
    tpu.vector_store %arg14[%c1_132, %c1_133, %c0_134], %104 {strides = array<i32>} : memref<10x5x32xbf16, #tpu.memory_space<vmem>>, vector<8x4x16xbf16>,
    %106 = vector.extract_strided_slice %103 {offsets = [0, 1, 0], sizes = [8, 3, 16], strides = [1, 1, 1]} : vector<8x4x32xbf16> to vector<8x3x16xbf16>
    %c1_135 = arith.constant 1 : index
    %c1_136 = arith.constant 1 : index
    %c16_137 = arith.constant 16 : index
    %107 = vector.load %arg14[%c1_135, %c1_136, %c16_137] : memref<10x5x32xbf16, #tpu.memory_space<vmem>>, vector<8x3x16xbf16>
    tpu.vector_store %arg14[%c1_135, %c1_136, %c16_137], %106 {strides = array<i32>} : memref<10x5x32xbf16, #tpu.memory_space<vmem>>, vector<8x3x16xbf16>,
    %108 = vector.extract_strided_slice %103 {offsets = [0, 3, 0], sizes = [8, 1, 16], strides = [1, 1, 1]} : vector<8x4x32xbf16> to vector<8x1x16xbf16>
    %c1_138 = arith.constant 1 : index
    %c4 = arith.constant 4 : index
    %c16_139 = arith.constant 16 : index
    %109 = vector.load %arg14[%c1_138, %c4, %c16_139] : memref<10x5x32xbf16, #tpu.memory_space<vmem>>, vector<8x1x16xbf16>
    tpu.vector_store %arg14[%c1_138, %c4, %c16_139], %108 {strides = array<i32>} : memref<10x5x32xbf16, #tpu.memory_space<vmem>>, vector<8x1x16xbf16>,
    %110 = vector.extract_strided_slice %103 {offsets = [0, 0, 16], sizes = [8, 1, 16], strides = [1, 1, 1]} : vector<8x4x32xbf16> to vector<8x1x16xbf16>
    %c1_140 = arith.constant 1 : index
    %c0_141 = arith.constant 0 : index
    %c0_142 = arith.constant 0 : index
    %111 = vector.load %arg14[%c1_140, %c0_141, %c0_142] : memref<10x5x32xbf16, #tpu.memory_space<vmem>>, vector<8x1x16xbf16>
    tpu.vector_store %arg14[%c1_140, %c0_141, %c0_142], %110 {strides = array<i32>} : memref<10x5x32xbf16, #tpu.memory_space<vmem>>, vector<8x1x16xbf16>,
    %112 = vector.extract_strided_slice %103 {offsets = [0, 0, 0], sizes = [8, 1, 16], strides = [1, 1, 1]} : vector<8x4x32xbf16> to vector<8x1x16xbf16>
    %c1_143 = arith.constant 1 : index
    %c0_144 = arith.constant 0 : index
    %c16_145 = arith.constant 16 : index
    %113 = vector.load %arg14[%c1_143, %c0_144, %c16_145] : memref<10x5x32xbf16, #tpu.memory_space<vmem>>, vector<8x1x16xbf16>
    tpu.vector_store %arg14[%c1_143, %c0_144, %c16_145], %112 {strides = array<i32>} : memref<10x5x32xbf16, #tpu.memory_space<vmem>>, vector<8x1x16xbf16>,
    %c2_146 = arith.constant 2 : index
    %c0_147 = arith.constant 0 : index
    %c0_148 = arith.constant 0 : index
    %114 = vector.load %arg14[%c2_146, %c0_147, %c0_148] : memref<10x5x32xbf16, #tpu.memory_space<vmem>>, vector<1x5x32xbf16>
    %c0_149 = arith.constant 0 : index
    %c0_150 = arith.constant 0 : index
    %c0_151 = arith.constant 0 : index
    %115 = vector.load %arg14[%c0_149, %c0_150, %c0_151] : memref<10x5x32xbf16, #tpu.memory_space<vmem>>, vector<1x5x32xbf16>
    tpu.vector_store %arg14[%c0_149, %c0_150, %c0_151], %114 {strides = array<i32>} : memref<10x5x32xbf16, #tpu.memory_space<vmem>>, vector<1x5x32xbf16>,
    %c7 = arith.constant 7 : index
    %c0_152 = arith.constant 0 : index
    %c0_153 = arith.constant 0 : index
    %116 = vector.load %arg14[%c7, %c0_152, %c0_153] : memref<10x5x32xbf16, #tpu.memory_space<vmem>>, vector<1x5x32xbf16>
    %c9 = arith.constant 9 : index
    %c0_154 = arith.constant 0 : index
    %c0_155 = arith.constant 0 : index
    %117 = vector.load %arg14[%c9, %c0_154, %c0_155] : memref<10x5x32xbf16, #tpu.memory_space<vmem>>, vector<1x5x32xbf16>
    tpu.vector_store %arg14[%c9, %c0_154, %c0_155], %116 {strides = array<i32>} : memref<10x5x32xbf16, #tpu.memory_space<vmem>>, vector<1x5x32xbf16>,
    %c0_156 = arith.constant 0 : index
    %c0_157 = arith.constant 0 : index
    %c0_158 = arith.constant 0 : index
    %118 = tpu.strided_load %arg14[%c0_156, %c0_157, %c0_158] {strides = array<i32: 2, 1, 1>} : memref<10x5x32xbf16, #tpu.memory_space<vmem>>, vector<4x4x32xbf16>
    %c0_159 = arith.constant 0 : index
    %c0_160 = arith.constant 0 : index
    %c0_161 = arith.constant 0 : index
    %119 = vector.load %arg19[%c0_159, %c0_160, %c0_161] : memref<4x4x256xbf16, #tpu.memory_space<vmem>>, vector<4x4x32xbf16>
    tpu.vector_store %arg19[%c0_159, %c0_160, %c0_161], %118 {strides = array<i32>} : memref<4x4x256xbf16, #tpu.memory_space<vmem>>, vector<4x4x32xbf16>,
    %c0_162 = arith.constant 0 : index
    %c1_163 = arith.constant 1 : index
    %c0_164 = arith.constant 0 : index
    %120 = tpu.strided_load %arg14[%c0_162, %c1_163, %c0_164] {strides = array<i32: 2, 1, 1>} : memref<10x5x32xbf16, #tpu.memory_space<vmem>>, vector<4x4x32xbf16>
    %c0_165 = arith.constant 0 : index
    %c0_166 = arith.constant 0 : index
    %c32_167 = arith.constant 32 : index
    %121 = vector.load %arg19[%c0_165, %c0_166, %c32_167] : memref<4x4x256xbf16, #tpu.memory_space<vmem>>, vector<4x4x32xbf16>
    tpu.vector_store %arg19[%c0_165, %c0_166, %c32_167], %120 {strides = array<i32>} : memref<4x4x256xbf16, #tpu.memory_space<vmem>>, vector<4x4x32xbf16>,
    %c1_168 = arith.constant 1 : index
    %c0_169 = arith.constant 0 : index
    %c0_170 = arith.constant 0 : index
    %122 = tpu.strided_load %arg14[%c1_168, %c0_169, %c0_170] {strides = array<i32: 2, 1, 1>} : memref<10x5x32xbf16, #tpu.memory_space<vmem>>, vector<4x4x32xbf16>
    %c0_171 = arith.constant 0 : index
    %c0_172 = arith.constant 0 : index
    %c64_173 = arith.constant 64 : index
    %123 = vector.load %arg19[%c0_171, %c0_172, %c64_173] : memref<4x4x256xbf16, #tpu.memory_space<vmem>>, vector<4x4x32xbf16>
    tpu.vector_store %arg19[%c0_171, %c0_172, %c64_173], %122 {strides = array<i32>} : memref<4x4x256xbf16, #tpu.memory_space<vmem>>, vector<4x4x32xbf16>,
    %c1_174 = arith.constant 1 : index
    %c1_175 = arith.constant 1 : index
    %c0_176 = arith.constant 0 : index
    %124 = tpu.strided_load %arg14[%c1_174, %c1_175, %c0_176] {strides = array<i32: 2, 1, 1>} : memref<10x5x32xbf16, #tpu.memory_space<vmem>>, vector<4x4x32xbf16>
    %c0_177 = arith.constant 0 : index
    %c0_178 = arith.constant 0 : index
    %c96_179 = arith.constant 96 : index
    %125 = vector.load %arg19[%c0_177, %c0_178, %c96_179] : memref<4x4x256xbf16, #tpu.memory_space<vmem>>, vector<4x4x32xbf16>
    tpu.vector_store %arg19[%c0_177, %c0_178, %c96_179], %124 {strides = array<i32>} : memref<4x4x256xbf16, #tpu.memory_space<vmem>>, vector<4x4x32xbf16>,
    %c2_180 = arith.constant 2 : index
    %c0_181 = arith.constant 0 : index
    %c0_182 = arith.constant 0 : index
    %126 = tpu.strided_load %arg14[%c2_180, %c0_181, %c0_182] {strides = array<i32: 2, 1, 1>} : memref<10x5x32xbf16, #tpu.memory_space<vmem>>, vector<4x4x32xbf16>
    %c0_183 = arith.constant 0 : index
    %c0_184 = arith.constant 0 : index
    %c128 = arith.constant 128 : index
    %127 = vector.load %arg19[%c0_183, %c0_184, %c128] : memref<4x4x256xbf16, #tpu.memory_space<vmem>>, vector<4x4x32xbf16>
    tpu.vector_store %arg19[%c0_183, %c0_184, %c128], %126 {strides = array<i32>} : memref<4x4x256xbf16, #tpu.memory_space<vmem>>, vector<4x4x32xbf16>,
    %c2_185 = arith.constant 2 : index
    %c1_186 = arith.constant 1 : index
    %c0_187 = arith.constant 0 : index
    %128 = tpu.strided_load %arg14[%c2_185, %c1_186, %c0_187] {strides = array<i32: 2, 1, 1>} : memref<10x5x32xbf16, #tpu.memory_space<vmem>>, vector<4x4x32xbf16>
    %c0_188 = arith.constant 0 : index
    %c0_189 = arith.constant 0 : index
    %c160 = arith.constant 160 : index
    %129 = vector.load %arg19[%c0_188, %c0_189, %c160] : memref<4x4x256xbf16, #tpu.memory_space<vmem>>, vector<4x4x32xbf16>
    tpu.vector_store %arg19[%c0_188, %c0_189, %c160], %128 {strides = array<i32>} : memref<4x4x256xbf16, #tpu.memory_space<vmem>>, vector<4x4x32xbf16>,
    %c3_190 = arith.constant 3 : index
    %c0_191 = arith.constant 0 : index
    %c0_192 = arith.constant 0 : index
    %130 = tpu.strided_load %arg14[%c3_190, %c0_191, %c0_192] {strides = array<i32: 2, 1, 1>} : memref<10x5x32xbf16, #tpu.memory_space<vmem>>, vector<4x4x32xbf16>
    %c0_193 = arith.constant 0 : index
    %c0_194 = arith.constant 0 : index
    %c192 = arith.constant 192 : index
    %131 = vector.load %arg19[%c0_193, %c0_194, %c192] : memref<4x4x256xbf16, #tpu.memory_space<vmem>>, vector<4x4x32xbf16>
    tpu.vector_store %arg19[%c0_193, %c0_194, %c192], %130 {strides = array<i32>} : memref<4x4x256xbf16, #tpu.memory_space<vmem>>, vector<4x4x32xbf16>,
    %c3_195 = arith.constant 3 : index
    %c1_196 = arith.constant 1 : index
    %c0_197 = arith.constant 0 : index
    %132 = tpu.strided_load %arg14[%c3_195, %c1_196, %c0_197] {strides = array<i32: 2, 1, 1>} : memref<10x5x32xbf16, #tpu.memory_space<vmem>>, vector<4x4x32xbf16>
    %c0_198 = arith.constant 0 : index
    %c0_199 = arith.constant 0 : index
    %c224 = arith.constant 224 : index
    %133 = vector.load %arg19[%c0_198, %c0_199, %c224] : memref<4x4x256xbf16, #tpu.memory_space<vmem>>, vector<4x4x32xbf16>
    tpu.vector_store %arg19[%c0_198, %c0_199, %c224], %132 {strides = array<i32>} : memref<4x4x256xbf16, #tpu.memory_space<vmem>>, vector<4x4x32xbf16>,
    %c0_200 = arith.constant 0 : index
    %c0_201 = arith.constant 0 : index
    %c0_202 = arith.constant 0 : index
    %134 = vector.load %arg19[%c0_200, %c0_201, %c0_202] : memref<4x4x256xbf16, #tpu.memory_space<vmem>>, vector<4x4x256xbf16>
    %135 = vector.shape_cast %134 : vector<4x4x256xbf16> to vector<16x256xbf16>
    %c0_203 = arith.constant 0 : index
    %c0_204 = arith.constant 0 : index
    %136 = vector.load %arg6[%c0_203, %c0_204] : memref<32x256xbf16, #tpu.memory_space<vmem>>, vector<32x256xbf16>
    %c0_205 = arith.constant 0 : index
    %c0_206 = arith.constant 0 : index
    %137 = vector.load %arg7[%c0_205, %c0_206] : memref<1x32xf32, #tpu.memory_space<vmem>>, vector<1x32xf32>
    %cst_207 = arith.constant dense<0.000000e+00> : vector<16x32xf32>
    %138 = tpu.matmul %135, %136, %cst_207 {dimension_numbers = #tpu.dot_dimension_numbers<[1], [1], [0], [0], [0, 0, 1, 0], [], []>} : vector<16x256xbf16>, vector<32x256xbf16>, vector<16x32xf32> -> vector<16x32xf32>
    %139 = vector.broadcast %137 : vector<1x32xf32> to vector<16x32xf32>
    %140 = arith.addf %138, %139 : vector<16x32xf32>
    %cst_208 = arith.constant dense<0.000000e+00> : vector<32xf32>
    %141 = vector.multi_reduction <add>, %140, %cst_208 [0] : vector<16x32xf32> to vector<32xf32>
    %142 = vector.shape_cast %141 : vector<32xf32> to vector<1x32xf32>
    %cst_209 = arith.constant 6.250000e-02 : f32
    %143 = vector.broadcast %cst_209 : f32 to vector<1x32xf32>
    %144 = arith.mulf %142, %143 : vector<1x32xf32>
    %145 = arith.mulf %140, %140 : vector<16x32xf32>
    %cst_210 = arith.constant dense<0.000000e+00> : vector<32xf32>
    %146 = vector.multi_reduction <add>, %145, %cst_210 [0] : vector<16x32xf32> to vector<32xf32>
    %147 = vector.shape_cast %146 : vector<32xf32> to vector<1x32xf32>
    %cst_211 = arith.constant 6.250000e-02 : f32
    %148 = vector.broadcast %cst_211 : f32 to vector<1x32xf32>
    %149 = arith.mulf %147, %148 : vector<1x32xf32>
    %150 = arith.mulf %144, %144 : vector<1x32xf32>
    %151 = arith.subf %149, %150 : vector<1x32xf32>
    %152 = vector.broadcast %144 : vector<1x32xf32> to vector<16x32xf32>
    %153 = arith.subf %140, %152 : vector<16x32xf32>
    %cst_212 = arith.constant 9.99999974E-6 : f32
    %154 = vector.broadcast %cst_212 : f32 to vector<1x32xf32>
    %155 = arith.addf %151, %154 : vector<1x32xf32>
    %156 = math.rsqrt %155 : vector<1x32xf32>
    %157 = vector.broadcast %156 : vector<1x32xf32> to vector<16x32xf32>
    %158 = arith.mulf %153, %157 : vector<16x32xf32>
    %cst_213 = arith.constant 2.000000e-01 : f32
    %159 = vector.broadcast %cst_213 : f32 to vector<16x32xf32>
    %160 = arith.mulf %159, %158 : vector<16x32xf32>
    %161 = arith.maximumf %158, %160 : vector<16x32xf32>
    %162 = arith.truncf %161 : vector<16x32xf32> to vector<16x32xbf16>
    %163 = vector.shape_cast %162 : vector<16x32xbf16> to vector<4x4x32xbf16>
    %c1_214 = arith.constant 1 : index
    %c1_215 = arith.constant 1 : index
    %c0_216 = arith.constant 0 : index
    %164 = vector.load %arg15[%c1_214, %c1_215, %c0_216] : memref<6x6x32xbf16, #tpu.memory_space<vmem>>, vector<4x4x32xbf16>
    tpu.vector_store %arg15[%c1_214, %c1_215, %c0_216], %163 {strides = array<i32>} : memref<6x6x32xbf16, #tpu.memory_space<vmem>>, vector<4x4x32xbf16>,
    %165 = vector.extract_strided_slice %163 {offsets = [0, 1, 0], sizes = [4, 1, 32], strides = [1, 1, 1]} : vector<4x4x32xbf16> to vector<4x1x32xbf16>
    %c1_217 = arith.constant 1 : index
    %c0_218 = arith.constant 0 : index
    %c0_219 = arith.constant 0 : index
    %166 = vector.load %arg15[%c1_217, %c0_218, %c0_219] : memref<6x6x32xbf16, #tpu.memory_space<vmem>>, vector<4x1x32xbf16>
    tpu.vector_store %arg15[%c1_217, %c0_218, %c0_219], %165 {strides = array<i32>} : memref<6x6x32xbf16, #tpu.memory_space<vmem>>, vector<4x1x32xbf16>,
    %167 = vector.extract_strided_slice %163 {offsets = [0, 2, 0], sizes = [4, 1, 32], strides = [1, 1, 1]} : vector<4x4x32xbf16> to vector<4x1x32xbf16>
    %c1_220 = arith.constant 1 : index
    %c5 = arith.constant 5 : index
    %c0_221 = arith.constant 0 : index
    %168 = vector.load %arg15[%c1_220, %c5, %c0_221] : memref<6x6x32xbf16, #tpu.memory_space<vmem>>, vector<4x1x32xbf16>
    tpu.vector_store %arg15[%c1_220, %c5, %c0_221], %167 {strides = array<i32>} : memref<6x6x32xbf16, #tpu.memory_space<vmem>>, vector<4x1x32xbf16>,
    %c2_222 = arith.constant 2 : index
    %c0_223 = arith.constant 0 : index
    %c0_224 = arith.constant 0 : index
    %169 = vector.load %arg15[%c2_222, %c0_223, %c0_224] : memref<6x6x32xbf16, #tpu.memory_space<vmem>>, vector<1x6x32xbf16>
    %c0_225 = arith.constant 0 : index
    %c0_226 = arith.constant 0 : index
    %c0_227 = arith.constant 0 : index
    %170 = vector.load %arg15[%c0_225, %c0_226, %c0_227] : memref<6x6x32xbf16, #tpu.memory_space<vmem>>, vector<1x6x32xbf16>
    tpu.vector_store %arg15[%c0_225, %c0_226, %c0_227], %169 {strides = array<i32>} : memref<6x6x32xbf16, #tpu.memory_space<vmem>>, vector<1x6x32xbf16>,
    %c3_228 = arith.constant 3 : index
    %c0_229 = arith.constant 0 : index
    %c0_230 = arith.constant 0 : index
    %171 = vector.load %arg15[%c3_228, %c0_229, %c0_230] : memref<6x6x32xbf16, #tpu.memory_space<vmem>>, vector<1x6x32xbf16>
    %c5_231 = arith.constant 5 : index
    %c0_232 = arith.constant 0 : index
    %c0_233 = arith.constant 0 : index
    %172 = vector.load %arg15[%c5_231, %c0_232, %c0_233] : memref<6x6x32xbf16, #tpu.memory_space<vmem>>, vector<1x6x32xbf16>
    tpu.vector_store %arg15[%c5_231, %c0_232, %c0_233], %171 {strides = array<i32>} : memref<6x6x32xbf16, #tpu.memory_space<vmem>>, vector<1x6x32xbf16>,
    %c0_234 = arith.constant 0 : index
    %c0_235 = arith.constant 0 : index
    %c0_236 = arith.constant 0 : index
    %173 = vector.load %arg15[%c0_234, %c0_235, %c0_236] : memref<6x6x32xbf16, #tpu.memory_space<vmem>>, vector<3x3x32xbf16>
    %c0_237 = arith.constant 0 : index
    %c0_238 = arith.constant 0 : index
    %c0_239 = arith.constant 0 : index
    %174 = vector.load %arg20[%c0_237, %c0_238, %c0_239] : memref<3x3x512xbf16, #tpu.memory_space<vmem>>, vector<3x3x32xbf16>
    tpu.vector_store %arg20[%c0_237, %c0_238, %c0_239], %173 {strides = array<i32>} : memref<3x3x512xbf16, #tpu.memory_space<vmem>>, vector<3x3x32xbf16>,
    %c0_240 = arith.constant 0 : index
    %c1_241 = arith.constant 1 : index
    %c0_242 = arith.constant 0 : index
    %175 = vector.load %arg15[%c0_240, %c1_241, %c0_242] : memref<6x6x32xbf16, #tpu.memory_space<vmem>>, vector<3x3x32xbf16>
    %c0_243 = arith.constant 0 : index
    %c0_244 = arith.constant 0 : index
    %c32_245 = arith.constant 32 : index
    %176 = vector.load %arg20[%c0_243, %c0_244, %c32_245] : memref<3x3x512xbf16, #tpu.memory_space<vmem>>, vector<3x3x32xbf16>
    tpu.vector_store %arg20[%c0_243, %c0_244, %c32_245], %175 {strides = array<i32>} : memref<3x3x512xbf16, #tpu.memory_space<vmem>>, vector<3x3x32xbf16>,
    %c0_246 = arith.constant 0 : index
    %c2_247 = arith.constant 2 : index
    %c0_248 = arith.constant 0 : index
    %177 = vector.load %arg15[%c0_246, %c2_247, %c0_248] : memref<6x6x32xbf16, #tpu.memory_space<vmem>>, vector<3x3x32xbf16>
    %c0_249 = arith.constant 0 : index
    %c0_250 = arith.constant 0 : index
    %c64_251 = arith.constant 64 : index
    %178 = vector.load %arg20[%c0_249, %c0_250, %c64_251] : memref<3x3x512xbf16, #tpu.memory_space<vmem>>, vector<3x3x32xbf16>
    tpu.vector_store %arg20[%c0_249, %c0_250, %c64_251], %177 {strides = array<i32>} : memref<3x3x512xbf16, #tpu.memory_space<vmem>>, vector<3x3x32xbf16>,
    %c0_252 = arith.constant 0 : index
    %c3_253 = arith.constant 3 : index
    %c0_254 = arith.constant 0 : index
    %179 = vector.load %arg15[%c0_252, %c3_253, %c0_254] : memref<6x6x32xbf16, #tpu.memory_space<vmem>>, vector<3x3x32xbf16>
    %c0_255 = arith.constant 0 : index
    %c0_256 = arith.constant 0 : index
    %c96_257 = arith.constant 96 : index
    %180 = vector.load %arg20[%c0_255, %c0_256, %c96_257] : memref<3x3x512xbf16, #tpu.memory_space<vmem>>, vector<3x3x32xbf16>
    tpu.vector_store %arg20[%c0_255, %c0_256, %c96_257], %179 {strides = array<i32>} : memref<3x3x512xbf16, #tpu.memory_space<vmem>>, vector<3x3x32xbf16>,
    %c1_258 = arith.constant 1 : index
    %c0_259 = arith.constant 0 : index
    %c0_260 = arith.constant 0 : index
    %181 = vector.load %arg15[%c1_258, %c0_259, %c0_260] : memref<6x6x32xbf16, #tpu.memory_space<vmem>>, vector<3x3x32xbf16>
    %c0_261 = arith.constant 0 : index
    %c0_262 = arith.constant 0 : index
    %c128_263 = arith.constant 128 : index
    %182 = vector.load %arg20[%c0_261, %c0_262, %c128_263] : memref<3x3x512xbf16, #tpu.memory_space<vmem>>, vector<3x3x32xbf16>
    tpu.vector_store %arg20[%c0_261, %c0_262, %c128_263], %181 {strides = array<i32>} : memref<3x3x512xbf16, #tpu.memory_space<vmem>>, vector<3x3x32xbf16>,
    %c1_264 = arith.constant 1 : index
    %c1_265 = arith.constant 1 : index
    %c0_266 = arith.constant 0 : index
    %183 = vector.load %arg15[%c1_264, %c1_265, %c0_266] : memref<6x6x32xbf16, #tpu.memory_space<vmem>>, vector<3x3x32xbf16>
    %c0_267 = arith.constant 0 : index
    %c0_268 = arith.constant 0 : index
    %c160_269 = arith.constant 160 : index
    %184 = vector.load %arg20[%c0_267, %c0_268, %c160_269] : memref<3x3x512xbf16, #tpu.memory_space<vmem>>, vector<3x3x32xbf16>
    tpu.vector_store %arg20[%c0_267, %c0_268, %c160_269], %183 {strides = array<i32>} : memref<3x3x512xbf16, #tpu.memory_space<vmem>>, vector<3x3x32xbf16>,
    %c1_270 = arith.constant 1 : index
    %c2_271 = arith.constant 2 : index
    %c0_272 = arith.constant 0 : index
    %185 = vector.load %arg15[%c1_270, %c2_271, %c0_272] : memref<6x6x32xbf16, #tpu.memory_space<vmem>>, vector<3x3x32xbf16>
    %c0_273 = arith.constant 0 : index
    %c0_274 = arith.constant 0 : index
    %c192_275 = arith.constant 192 : index
    %186 = vector.load %arg20[%c0_273, %c0_274, %c192_275] : memref<3x3x512xbf16, #tpu.memory_space<vmem>>, vector<3x3x32xbf16>
    tpu.vector_store %arg20[%c0_273, %c0_274, %c192_275], %185 {strides = array<i32>} : memref<3x3x512xbf16, #tpu.memory_space<vmem>>, vector<3x3x32xbf16>,
    %c1_276 = arith.constant 1 : index
    %c3_277 = arith.constant 3 : index
    %c0_278 = arith.constant 0 : index
    %187 = vector.load %arg15[%c1_276, %c3_277, %c0_278] : memref<6x6x32xbf16, #tpu.memory_space<vmem>>, vector<3x3x32xbf16>
    %c0_279 = arith.constant 0 : index
    %c0_280 = arith.constant 0 : index
    %c224_281 = arith.constant 224 : index
    %188 = vector.load %arg20[%c0_279, %c0_280, %c224_281] : memref<3x3x512xbf16, #tpu.memory_space<vmem>>, vector<3x3x32xbf16>
    tpu.vector_store %arg20[%c0_279, %c0_280, %c224_281], %187 {strides = array<i32>} : memref<3x3x512xbf16, #tpu.memory_space<vmem>>, vector<3x3x32xbf16>,
    %c2_282 = arith.constant 2 : index
    %c0_283 = arith.constant 0 : index
    %c0_284 = arith.constant 0 : index
    %189 = vector.load %arg15[%c2_282, %c0_283, %c0_284] : memref<6x6x32xbf16, #tpu.memory_space<vmem>>, vector<3x3x32xbf16>
    %c0_285 = arith.constant 0 : index
    %c0_286 = arith.constant 0 : index
    %c256 = arith.constant 256 : index
    %190 = vector.load %arg20[%c0_285, %c0_286, %c256] : memref<3x3x512xbf16, #tpu.memory_space<vmem>>, vector<3x3x32xbf16>
    tpu.vector_store %arg20[%c0_285, %c0_286, %c256], %189 {strides = array<i32>} : memref<3x3x512xbf16, #tpu.memory_space<vmem>>, vector<3x3x32xbf16>,
    %c2_287 = arith.constant 2 : index
    %c1_288 = arith.constant 1 : index
    %c0_289 = arith.constant 0 : index
    %191 = vector.load %arg15[%c2_287, %c1_288, %c0_289] : memref<6x6x32xbf16, #tpu.memory_space<vmem>>, vector<3x3x32xbf16>
    %c0_290 = arith.constant 0 : index
    %c0_291 = arith.constant 0 : index
    %c288 = arith.constant 288 : index
    %192 = vector.load %arg20[%c0_290, %c0_291, %c288] : memref<3x3x512xbf16, #tpu.memory_space<vmem>>, vector<3x3x32xbf16>
    tpu.vector_store %arg20[%c0_290, %c0_291, %c288], %191 {strides = array<i32>} : memref<3x3x512xbf16, #tpu.memory_space<vmem>>, vector<3x3x32xbf16>,
    %c2_292 = arith.constant 2 : index
    %c2_293 = arith.constant 2 : index
    %c0_294 = arith.constant 0 : index
    %193 = vector.load %arg15[%c2_292, %c2_293, %c0_294] : memref<6x6x32xbf16, #tpu.memory_space<vmem>>, vector<3x3x32xbf16>
    %c0_295 = arith.constant 0 : index
    %c0_296 = arith.constant 0 : index
    %c320 = arith.constant 320 : index
    %194 = vector.load %arg20[%c0_295, %c0_296, %c320] : memref<3x3x512xbf16, #tpu.memory_space<vmem>>, vector<3x3x32xbf16>
    tpu.vector_store %arg20[%c0_295, %c0_296, %c320], %193 {strides = array<i32>} : memref<3x3x512xbf16, #tpu.memory_space<vmem>>, vector<3x3x32xbf16>,
    %c2_297 = arith.constant 2 : index
    %c3_298 = arith.constant 3 : index
    %c0_299 = arith.constant 0 : index
    %195 = vector.load %arg15[%c2_297, %c3_298, %c0_299] : memref<6x6x32xbf16, #tpu.memory_space<vmem>>, vector<3x3x32xbf16>
    %c0_300 = arith.constant 0 : index
    %c0_301 = arith.constant 0 : index
    %c352 = arith.constant 352 : index
    %196 = vector.load %arg20[%c0_300, %c0_301, %c352] : memref<3x3x512xbf16, #tpu.memory_space<vmem>>, vector<3x3x32xbf16>
    tpu.vector_store %arg20[%c0_300, %c0_301, %c352], %195 {strides = array<i32>} : memref<3x3x512xbf16, #tpu.memory_space<vmem>>, vector<3x3x32xbf16>,
    %c3_302 = arith.constant 3 : index
    %c0_303 = arith.constant 0 : index
    %c0_304 = arith.constant 0 : index
    %197 = vector.load %arg15[%c3_302, %c0_303, %c0_304] : memref<6x6x32xbf16, #tpu.memory_space<vmem>>, vector<3x3x32xbf16>
    %c0_305 = arith.constant 0 : index
    %c0_306 = arith.constant 0 : index
    %c384 = arith.constant 384 : index
    %198 = vector.load %arg20[%c0_305, %c0_306, %c384] : memref<3x3x512xbf16, #tpu.memory_space<vmem>>, vector<3x3x32xbf16>
    tpu.vector_store %arg20[%c0_305, %c0_306, %c384], %197 {strides = array<i32>} : memref<3x3x512xbf16, #tpu.memory_space<vmem>>, vector<3x3x32xbf16>,
    %c3_307 = arith.constant 3 : index
    %c1_308 = arith.constant 1 : index
    %c0_309 = arith.constant 0 : index
    %199 = vector.load %arg15[%c3_307, %c1_308, %c0_309] : memref<6x6x32xbf16, #tpu.memory_space<vmem>>, vector<3x3x32xbf16>
    %c0_310 = arith.constant 0 : index
    %c0_311 = arith.constant 0 : index
    %c416 = arith.constant 416 : index
    %200 = vector.load %arg20[%c0_310, %c0_311, %c416] : memref<3x3x512xbf16, #tpu.memory_space<vmem>>, vector<3x3x32xbf16>
    tpu.vector_store %arg20[%c0_310, %c0_311, %c416], %199 {strides = array<i32>} : memref<3x3x512xbf16, #tpu.memory_space<vmem>>, vector<3x3x32xbf16>,
    %c3_312 = arith.constant 3 : index
    %c2_313 = arith.constant 2 : index
    %c0_314 = arith.constant 0 : index
    %201 = vector.load %arg15[%c3_312, %c2_313, %c0_314] : memref<6x6x32xbf16, #tpu.memory_space<vmem>>, vector<3x3x32xbf16>
    %c0_315 = arith.constant 0 : index
    %c0_316 = arith.constant 0 : index
    %c448 = arith.constant 448 : index
    %202 = vector.load %arg20[%c0_315, %c0_316, %c448] : memref<3x3x512xbf16, #tpu.memory_space<vmem>>, vector<3x3x32xbf16>
    tpu.vector_store %arg20[%c0_315, %c0_316, %c448], %201 {strides = array<i32>} : memref<3x3x512xbf16, #tpu.memory_space<vmem>>, vector<3x3x32xbf16>,
    %c3_317 = arith.constant 3 : index
    %c3_318 = arith.constant 3 : index
    %c0_319 = arith.constant 0 : index
    %203 = vector.load %arg15[%c3_317, %c3_318, %c0_319] : memref<6x6x32xbf16, #tpu.memory_space<vmem>>, vector<3x3x32xbf16>
    %c0_320 = arith.constant 0 : index
    %c0_321 = arith.constant 0 : index
    %c480 = arith.constant 480 : index
    %204 = vector.load %arg20[%c0_320, %c0_321, %c480] : memref<3x3x512xbf16, #tpu.memory_space<vmem>>, vector<3x3x32xbf16>
    tpu.vector_store %arg20[%c0_320, %c0_321, %c480], %203 {strides = array<i32>} : memref<3x3x512xbf16, #tpu.memory_space<vmem>>, vector<3x3x32xbf16>,
    %c0_322 = arith.constant 0 : index
    %c0_323 = arith.constant 0 : index
    %c0_324 = arith.constant 0 : index
    %205 = vector.load %arg20[%c0_322, %c0_323, %c0_324] : memref<3x3x512xbf16, #tpu.memory_space<vmem>>, vector<3x3x512xbf16>
    %206 = vector.shape_cast %205 : vector<3x3x512xbf16> to vector<9x512xbf16>
    %c0_325 = arith.constant 0 : index
    %c0_326 = arith.constant 0 : index
    %207 = vector.load %arg8[%c0_325, %c0_326] : memref<48x512xbf16, #tpu.memory_space<vmem>>, vector<48x512xbf16>
    %c0_327 = arith.constant 0 : index
    %c0_328 = arith.constant 0 : index
    %208 = vector.load %arg9[%c0_327, %c0_328] : memref<1x48xf32, #tpu.memory_space<vmem>>, vector<1x48xf32>
    %cst_329 = arith.constant dense<0.000000e+00> : vector<9x48xf32>
    %209 = tpu.matmul %206, %207, %cst_329 {dimension_numbers = #tpu.dot_dimension_numbers<[1], [1], [0], [0], [0, 0, 1, 0], [], []>} : vector<9x512xbf16>, vector<48x512xbf16>, vector<9x48xf32> -> vector<9x48xf32>
    %210 = vector.broadcast %208 : vector<1x48xf32> to vector<9x48xf32>
    %211 = arith.addf %209, %210 : vector<9x48xf32>
    %cst_330 = arith.constant dense<0.000000e+00> : vector<48xf32>
    %212 = vector.multi_reduction <add>, %211, %cst_330 [0] : vector<9x48xf32> to vector<48xf32>
    %213 = vector.shape_cast %212 : vector<48xf32> to vector<1x48xf32>
    %cst_331 = arith.constant 0.111111112 : f32
    %214 = vector.broadcast %cst_331 : f32 to vector<1x48xf32>
    %215 = arith.mulf %213, %214 : vector<1x48xf32>
    %216 = arith.mulf %211, %211 : vector<9x48xf32>
    %cst_332 = arith.constant dense<0.000000e+00> : vector<48xf32>
    %217 = vector.multi_reduction <add>, %216, %cst_332 [0] : vector<9x48xf32> to vector<48xf32>
    %218 = vector.shape_cast %217 : vector<48xf32> to vector<1x48xf32>
    %cst_333 = arith.constant 0.111111112 : f32
    %219 = vector.broadcast %cst_333 : f32 to vector<1x48xf32>
    %220 = arith.mulf %218, %219 : vector<1x48xf32>
    %221 = arith.mulf %215, %215 : vector<1x48xf32>
    %222 = arith.subf %220, %221 : vector<1x48xf32>
    %223 = vector.broadcast %215 : vector<1x48xf32> to vector<9x48xf32>
    %224 = arith.subf %211, %223 : vector<9x48xf32>
    %cst_334 = arith.constant 9.99999974E-6 : f32
    %225 = vector.broadcast %cst_334 : f32 to vector<1x48xf32>
    %226 = arith.addf %222, %225 : vector<1x48xf32>
    %227 = math.rsqrt %226 : vector<1x48xf32>
    %228 = vector.broadcast %227 : vector<1x48xf32> to vector<9x48xf32>
    %229 = arith.mulf %224, %228 : vector<9x48xf32>
    %cst_335 = arith.constant 2.000000e-01 : f32
    %230 = vector.broadcast %cst_335 : f32 to vector<9x48xf32>
    %231 = arith.mulf %230, %229 : vector<9x48xf32>
    %232 = arith.maximumf %229, %231 : vector<9x48xf32>
    %233 = arith.truncf %232 : vector<9x48xf32> to vector<9x48xbf16>
    %234 = vector.shape_cast %233 : vector<9x48xbf16> to vector<3x3x48xbf16>
    %c1_336 = arith.constant 1 : index
    %c1_337 = arith.constant 1 : index
    %c0_338 = arith.constant 0 : index
    %235 = vector.load %arg16[%c1_336, %c1_337, %c0_338] : memref<5x5x48xbf16, #tpu.memory_space<vmem>>, vector<3x3x48xbf16>
    tpu.vector_store %arg16[%c1_336, %c1_337, %c0_338], %234 {strides = array<i32>} : memref<5x5x48xbf16, #tpu.memory_space<vmem>>, vector<3x3x48xbf16>,
    %236 = vector.extract_strided_slice %234 {offsets = [0, 1, 0], sizes = [3, 1, 48], strides = [1, 1, 1]} : vector<3x3x48xbf16> to vector<3x1x48xbf16>
    %c1_339 = arith.constant 1 : index
    %c0_340 = arith.constant 0 : index
    %c0_341 = arith.constant 0 : index
    %237 = vector.load %arg16[%c1_339, %c0_340, %c0_341] : memref<5x5x48xbf16, #tpu.memory_space<vmem>>, vector<3x1x48xbf16>
    tpu.vector_store %arg16[%c1_339, %c0_340, %c0_341], %236 {strides = array<i32>} : memref<5x5x48xbf16, #tpu.memory_space<vmem>>, vector<3x1x48xbf16>,
    %238 = vector.extract_strided_slice %234 {offsets = [0, 1, 0], sizes = [3, 1, 48], strides = [1, 1, 1]} : vector<3x3x48xbf16> to vector<3x1x48xbf16>
    %c1_342 = arith.constant 1 : index
    %c4_343 = arith.constant 4 : index
    %c0_344 = arith.constant 0 : index
    %239 = vector.load %arg16[%c1_342, %c4_343, %c0_344] : memref<5x5x48xbf16, #tpu.memory_space<vmem>>, vector<3x1x48xbf16>
    tpu.vector_store %arg16[%c1_342, %c4_343, %c0_344], %238 {strides = array<i32>} : memref<5x5x48xbf16, #tpu.memory_space<vmem>>, vector<3x1x48xbf16>,
    %c2_345 = arith.constant 2 : index
    %c0_346 = arith.constant 0 : index
    %c0_347 = arith.constant 0 : index
    %240 = vector.load %arg16[%c2_345, %c0_346, %c0_347] : memref<5x5x48xbf16, #tpu.memory_space<vmem>>, vector<1x5x48xbf16>
    %c0_348 = arith.constant 0 : index
    %c0_349 = arith.constant 0 : index
    %c0_350 = arith.constant 0 : index
    %241 = vector.load %arg16[%c0_348, %c0_349, %c0_350] : memref<5x5x48xbf16, #tpu.memory_space<vmem>>, vector<1x5x48xbf16>
    tpu.vector_store %arg16[%c0_348, %c0_349, %c0_350], %240 {strides = array<i32>} : memref<5x5x48xbf16, #tpu.memory_space<vmem>>, vector<1x5x48xbf16>,
    %c2_351 = arith.constant 2 : index
    %c0_352 = arith.constant 0 : index
    %c0_353 = arith.constant 0 : index
    %242 = vector.load %arg16[%c2_351, %c0_352, %c0_353] : memref<5x5x48xbf16, #tpu.memory_space<vmem>>, vector<1x5x48xbf16>
    %c4_354 = arith.constant 4 : index
    %c0_355 = arith.constant 0 : index
    %c0_356 = arith.constant 0 : index
    %243 = vector.load %arg16[%c4_354, %c0_355, %c0_356] : memref<5x5x48xbf16, #tpu.memory_space<vmem>>, vector<1x5x48xbf16>
    tpu.vector_store %arg16[%c4_354, %c0_355, %c0_356], %242 {strides = array<i32>} : memref<5x5x48xbf16, #tpu.memory_space<vmem>>, vector<1x5x48xbf16>,
    %c0_357 = arith.constant 0 : index
    %c0_358 = arith.constant 0 : index
    %c0_359 = arith.constant 0 : index
    %244 = vector.load %arg16[%c0_357, %c0_358, %c0_359] : memref<5x5x48xbf16, #tpu.memory_space<vmem>>, vector<2x2x48xbf16>
    %c0_360 = arith.constant 0 : index
    %c0_361 = arith.constant 0 : index
    %c0_362 = arith.constant 0 : index
    %245 = vector.load %arg21[%c0_360, %c0_361, %c0_362] : memref<2x2x768xbf16, #tpu.memory_space<vmem>>, vector<2x2x48xbf16>
    tpu.vector_store %arg21[%c0_360, %c0_361, %c0_362], %244 {strides = array<i32>} : memref<2x2x768xbf16, #tpu.memory_space<vmem>>, vector<2x2x48xbf16>,
    %c0_363 = arith.constant 0 : index
    %c1_364 = arith.constant 1 : index
    %c0_365 = arith.constant 0 : index
    %246 = vector.load %arg16[%c0_363, %c1_364, %c0_365] : memref<5x5x48xbf16, #tpu.memory_space<vmem>>, vector<2x2x48xbf16>
    %c0_366 = arith.constant 0 : index
    %c0_367 = arith.constant 0 : index
    %c48_368 = arith.constant 48 : index
    %247 = vector.load %arg21[%c0_366, %c0_367, %c48_368] : memref<2x2x768xbf16, #tpu.memory_space<vmem>>, vector<2x2x48xbf16>
    tpu.vector_store %arg21[%c0_366, %c0_367, %c48_368], %246 {strides = array<i32>} : memref<2x2x768xbf16, #tpu.memory_space<vmem>>, vector<2x2x48xbf16>,
    %c0_369 = arith.constant 0 : index
    %c2_370 = arith.constant 2 : index
    %c0_371 = arith.constant 0 : index
    %248 = vector.load %arg16[%c0_369, %c2_370, %c0_371] : memref<5x5x48xbf16, #tpu.memory_space<vmem>>, vector<2x2x48xbf16>
    %c0_372 = arith.constant 0 : index
    %c0_373 = arith.constant 0 : index
    %c96_374 = arith.constant 96 : index
    %249 = vector.load %arg21[%c0_372, %c0_373, %c96_374] : memref<2x2x768xbf16, #tpu.memory_space<vmem>>, vector<2x2x48xbf16>
    tpu.vector_store %arg21[%c0_372, %c0_373, %c96_374], %248 {strides = array<i32>} : memref<2x2x768xbf16, #tpu.memory_space<vmem>>, vector<2x2x48xbf16>,
    %c0_375 = arith.constant 0 : index
    %c3_376 = arith.constant 3 : index
    %c0_377 = arith.constant 0 : index
    %250 = vector.load %arg16[%c0_375, %c3_376, %c0_377] : memref<5x5x48xbf16, #tpu.memory_space<vmem>>, vector<2x2x48xbf16>
    %c0_378 = arith.constant 0 : index
    %c0_379 = arith.constant 0 : index
    %c144 = arith.constant 144 : index
    %251 = vector.load %arg21[%c0_378, %c0_379, %c144] : memref<2x2x768xbf16, #tpu.memory_space<vmem>>, vector<2x2x48xbf16>
    tpu.vector_store %arg21[%c0_378, %c0_379, %c144], %250 {strides = array<i32>} : memref<2x2x768xbf16, #tpu.memory_space<vmem>>, vector<2x2x48xbf16>,
    %c1_380 = arith.constant 1 : index
    %c0_381 = arith.constant 0 : index
    %c0_382 = arith.constant 0 : index
    %252 = vector.load %arg16[%c1_380, %c0_381, %c0_382] : memref<5x5x48xbf16, #tpu.memory_space<vmem>>, vector<2x2x48xbf16>
    %c0_383 = arith.constant 0 : index
    %c0_384 = arith.constant 0 : index
    %c192_385 = arith.constant 192 : index
    %253 = vector.load %arg21[%c0_383, %c0_384, %c192_385] : memref<2x2x768xbf16, #tpu.memory_space<vmem>>, vector<2x2x48xbf16>
    tpu.vector_store %arg21[%c0_383, %c0_384, %c192_385], %252 {strides = array<i32>} : memref<2x2x768xbf16, #tpu.memory_space<vmem>>, vector<2x2x48xbf16>,
    %c1_386 = arith.constant 1 : index
    %c1_387 = arith.constant 1 : index
    %c0_388 = arith.constant 0 : index
    %254 = vector.load %arg16[%c1_386, %c1_387, %c0_388] : memref<5x5x48xbf16, #tpu.memory_space<vmem>>, vector<2x2x48xbf16>
    %c0_389 = arith.constant 0 : index
    %c0_390 = arith.constant 0 : index
    %c240 = arith.constant 240 : index
    %255 = vector.load %arg21[%c0_389, %c0_390, %c240] : memref<2x2x768xbf16, #tpu.memory_space<vmem>>, vector<2x2x48xbf16>
    tpu.vector_store %arg21[%c0_389, %c0_390, %c240], %254 {strides = array<i32>} : memref<2x2x768xbf16, #tpu.memory_space<vmem>>, vector<2x2x48xbf16>,
    %c1_391 = arith.constant 1 : index
    %c2_392 = arith.constant 2 : index
    %c0_393 = arith.constant 0 : index
    %256 = vector.load %arg16[%c1_391, %c2_392, %c0_393] : memref<5x5x48xbf16, #tpu.memory_space<vmem>>, vector<2x2x48xbf16>
    %c0_394 = arith.constant 0 : index
    %c0_395 = arith.constant 0 : index
    %c288_396 = arith.constant 288 : index
    %257 = vector.load %arg21[%c0_394, %c0_395, %c288_396] : memref<2x2x768xbf16, #tpu.memory_space<vmem>>, vector<2x2x48xbf16>
    tpu.vector_store %arg21[%c0_394, %c0_395, %c288_396], %256 {strides = array<i32>} : memref<2x2x768xbf16, #tpu.memory_space<vmem>>, vector<2x2x48xbf16>,
    %c1_397 = arith.constant 1 : index
    %c3_398 = arith.constant 3 : index
    %c0_399 = arith.constant 0 : index
    %258 = vector.load %arg16[%c1_397, %c3_398, %c0_399] : memref<5x5x48xbf16, #tpu.memory_space<vmem>>, vector<2x2x48xbf16>
    %c0_400 = arith.constant 0 : index
    %c0_401 = arith.constant 0 : index
    %c336 = arith.constant 336 : index
    %259 = vector.load %arg21[%c0_400, %c0_401, %c336] : memref<2x2x768xbf16, #tpu.memory_space<vmem>>, vector<2x2x48xbf16>
    tpu.vector_store %arg21[%c0_400, %c0_401, %c336], %258 {strides = array<i32>} : memref<2x2x768xbf16, #tpu.memory_space<vmem>>, vector<2x2x48xbf16>,
    %c2_402 = arith.constant 2 : index
    %c0_403 = arith.constant 0 : index
    %c0_404 = arith.constant 0 : index
    %260 = vector.load %arg16[%c2_402, %c0_403, %c0_404] : memref<5x5x48xbf16, #tpu.memory_space<vmem>>, vector<2x2x48xbf16>
    %c0_405 = arith.constant 0 : index
    %c0_406 = arith.constant 0 : index
    %c384_407 = arith.constant 384 : index
    %261 = vector.load %arg21[%c0_405, %c0_406, %c384_407] : memref<2x2x768xbf16, #tpu.memory_space<vmem>>, vector<2x2x48xbf16>
    tpu.vector_store %arg21[%c0_405, %c0_406, %c384_407], %260 {strides = array<i32>} : memref<2x2x768xbf16, #tpu.memory_space<vmem>>, vector<2x2x48xbf16>,
    %c2_408 = arith.constant 2 : index
    %c1_409 = arith.constant 1 : index
    %c0_410 = arith.constant 0 : index
    %262 = vector.load %arg16[%c2_408, %c1_409, %c0_410] : memref<5x5x48xbf16, #tpu.memory_space<vmem>>, vector<2x2x48xbf16>
    %c0_411 = arith.constant 0 : index
    %c0_412 = arith.constant 0 : index
    %c432 = arith.constant 432 : index
    %263 = vector.load %arg21[%c0_411, %c0_412, %c432] : memref<2x2x768xbf16, #tpu.memory_space<vmem>>, vector<2x2x48xbf16>
    tpu.vector_store %arg21[%c0_411, %c0_412, %c432], %262 {strides = array<i32>} : memref<2x2x768xbf16, #tpu.memory_space<vmem>>, vector<2x2x48xbf16>,
    %c2_413 = arith.constant 2 : index
    %c2_414 = arith.constant 2 : index
    %c0_415 = arith.constant 0 : index
    %264 = vector.load %arg16[%c2_413, %c2_414, %c0_415] : memref<5x5x48xbf16, #tpu.memory_space<vmem>>, vector<2x2x48xbf16>
    %c0_416 = arith.constant 0 : index
    %c0_417 = arith.constant 0 : index
    %c480_418 = arith.constant 480 : index
    %265 = vector.load %arg21[%c0_416, %c0_417, %c480_418] : memref<2x2x768xbf16, #tpu.memory_space<vmem>>, vector<2x2x48xbf16>
    tpu.vector_store %arg21[%c0_416, %c0_417, %c480_418], %264 {strides = array<i32>} : memref<2x2x768xbf16, #tpu.memory_space<vmem>>, vector<2x2x48xbf16>,
    %c2_419 = arith.constant 2 : index
    %c3_420 = arith.constant 3 : index
    %c0_421 = arith.constant 0 : index
    %266 = vector.load %arg16[%c2_419, %c3_420, %c0_421] : memref<5x5x48xbf16, #tpu.memory_space<vmem>>, vector<2x2x48xbf16>
    %c0_422 = arith.constant 0 : index
    %c0_423 = arith.constant 0 : index
    %c528 = arith.constant 528 : index
    %267 = vector.load %arg21[%c0_422, %c0_423, %c528] : memref<2x2x768xbf16, #tpu.memory_space<vmem>>, vector<2x2x48xbf16>
    tpu.vector_store %arg21[%c0_422, %c0_423, %c528], %266 {strides = array<i32>} : memref<2x2x768xbf16, #tpu.memory_space<vmem>>, vector<2x2x48xbf16>,
    %c3_424 = arith.constant 3 : index
    %c0_425 = arith.constant 0 : index
    %c0_426 = arith.constant 0 : index
    %268 = vector.load %arg16[%c3_424, %c0_425, %c0_426] : memref<5x5x48xbf16, #tpu.memory_space<vmem>>, vector<2x2x48xbf16>
    %c0_427 = arith.constant 0 : index
    %c0_428 = arith.constant 0 : index
    %c576 = arith.constant 576 : index
    %269 = vector.load %arg21[%c0_427, %c0_428, %c576] : memref<2x2x768xbf16, #tpu.memory_space<vmem>>, vector<2x2x48xbf16>
    tpu.vector_store %arg21[%c0_427, %c0_428, %c576], %268 {strides = array<i32>} : memref<2x2x768xbf16, #tpu.memory_space<vmem>>, vector<2x2x48xbf16>,
    %c3_429 = arith.constant 3 : index
    %c1_430 = arith.constant 1 : index
    %c0_431 = arith.constant 0 : index
    %270 = vector.load %arg16[%c3_429, %c1_430, %c0_431] : memref<5x5x48xbf16, #tpu.memory_space<vmem>>, vector<2x2x48xbf16>
    %c0_432 = arith.constant 0 : index
    %c0_433 = arith.constant 0 : index
    %c624 = arith.constant 624 : index
    %271 = vector.load %arg21[%c0_432, %c0_433, %c624] : memref<2x2x768xbf16, #tpu.memory_space<vmem>>, vector<2x2x48xbf16>
    tpu.vector_store %arg21[%c0_432, %c0_433, %c624], %270 {strides = array<i32>} : memref<2x2x768xbf16, #tpu.memory_space<vmem>>, vector<2x2x48xbf16>,
    %c3_434 = arith.constant 3 : index
    %c2_435 = arith.constant 2 : index
    %c0_436 = arith.constant 0 : index
    %272 = vector.load %arg16[%c3_434, %c2_435, %c0_436] : memref<5x5x48xbf16, #tpu.memory_space<vmem>>, vector<2x2x48xbf16>
    %c0_437 = arith.constant 0 : index
    %c0_438 = arith.constant 0 : index
    %c672 = arith.constant 672 : index
    %273 = vector.load %arg21[%c0_437, %c0_438, %c672] : memref<2x2x768xbf16, #tpu.memory_space<vmem>>, vector<2x2x48xbf16>
    tpu.vector_store %arg21[%c0_437, %c0_438, %c672], %272 {strides = array<i32>} : memref<2x2x768xbf16, #tpu.memory_space<vmem>>, vector<2x2x48xbf16>,
    %c3_439 = arith.constant 3 : index
    %c3_440 = arith.constant 3 : index
    %c0_441 = arith.constant 0 : index
    %274 = vector.load %arg16[%c3_439, %c3_440, %c0_441] : memref<5x5x48xbf16, #tpu.memory_space<vmem>>, vector<2x2x48xbf16>
    %c0_442 = arith.constant 0 : index
    %c0_443 = arith.constant 0 : index
    %c720 = arith.constant 720 : index
    %275 = vector.load %arg21[%c0_442, %c0_443, %c720] : memref<2x2x768xbf16, #tpu.memory_space<vmem>>, vector<2x2x48xbf16>
    tpu.vector_store %arg21[%c0_442, %c0_443, %c720], %274 {strides = array<i32>} : memref<2x2x768xbf16, #tpu.memory_space<vmem>>, vector<2x2x48xbf16>,
    %c0_444 = arith.constant 0 : index
    %c0_445 = arith.constant 0 : index
    %c0_446 = arith.constant 0 : index
    %276 = vector.load %arg21[%c0_444, %c0_445, %c0_446] : memref<2x2x768xbf16, #tpu.memory_space<vmem>>, vector<2x2x768xbf16>
    %277 = vector.shape_cast %276 : vector<2x2x768xbf16> to vector<4x768xbf16>
    %c0_447 = arith.constant 0 : index
    %c0_448 = arith.constant 0 : index
    %278 = vector.load %arg10[%c0_447, %c0_448] : memref<1x768xbf16, #tpu.memory_space<vmem>>, vector<1x768xbf16>
    %c0_449 = arith.constant 0 : index
    %c0_450 = arith.constant 0 : index
    %279 = vector.load %arg11[%c0_449, %c0_450] : memref<1x1xf32, #tpu.memory_space<vmem>>, vector<1x1xf32>
    %cst_451 = arith.constant dense<0.000000e+00> : vector<1x4xf32>
    %280 = tpu.matmul %278, %277, %cst_451 {dimension_numbers = #tpu.dot_dimension_numbers<[1], [1], [0], [0], [0, 0, 1, 0], [], []>} : vector<1x768xbf16>, vector<4x768xbf16>, vector<1x4xf32> -> vector<1x4xf32>
    %281 = vector.broadcast %279 : vector<1x1xf32> to vector<1x4xf32>
    %282 = arith.addf %280, %281 : vector<1x4xf32>
    %283 = arith.negf %282 : vector<1x4xf32>
    %284 = math.exp %283 : vector<1x4xf32>
    %cst_452 = arith.constant 1.000000e+00 : f32
    %285 = vector.broadcast %cst_452 : f32 to vector<1x4xf32>
    %286 = arith.addf %285, %284 : vector<1x4xf32>
    %287 = arith.divf %285, %286 : vector<1x4xf32>
    %c0_453 = arith.constant 0 : index
    %c0_454 = arith.constant 0 : index
    %c0_455 = arith.constant 0 : index
    %288 = vector.load %arg12[%c0_453, %c0_454, %c0_455] : memref<1x1x4xf32, #tpu.memory_space<vmem>>, vector<1x1x4xf32>
    %289 = vector.shape_cast %288 : vector<1x1x4xf32> to vector<1x4xf32>
    %290 = vector.shape_cast %287 : vector<1x4xf32> to vector<1x1x4xf32>
    tpu.vector_store %arg12[%c0_453, %c0_454, %c0_455], %290 {strides = array<i32>} : memref<1x1x4xf32, #tpu.memory_space<vmem>>, vector<1x1x4xf32>,
    return
  }
  func.func @transform_0(%arg0: i32) -> (i32, i32, i32, i32) {
    %c0_i32 = arith.constant 0 : i32
    %c0_i32_0 = arith.constant 0 : i32
    %c0_i32_1 = arith.constant 0 : i32
    %c0_i32_2 = arith.constant 0 : i32
    return %arg0, %c0_i32, %c0_i32_0, %c0_i32_1 : i32, i32, i32, i32
  }
  func.func @transform_1(%arg0: i32) -> (i32, i32) {
    %c0_i32 = arith.constant 0 : i32
    %c0_i32_0 = arith.constant 0 : i32
    %c0_i32_1 = arith.constant 0 : i32
    return %c0_i32, %c0_i32_0 : i32, i32
  }
  func.func @transform_2(%arg0: i32) -> (i32, i32) {
    %c0_i32 = arith.constant 0 : i32
    %c0_i32_0 = arith.constant 0 : i32
    %c0_i32_1 = arith.constant 0 : i32
    return %c0_i32, %c0_i32_0 : i32, i32
  }
  func.func @transform_3(%arg0: i32) -> (i32, i32) {
    %c0_i32 = arith.constant 0 : i32
    %c0_i32_0 = arith.constant 0 : i32
    %c0_i32_1 = arith.constant 0 : i32
    return %c0_i32, %c0_i32_0 : i32, i32
  }
  func.func @transform_4(%arg0: i32) -> (i32, i32) {
    %c0_i32 = arith.constant 0 : i32
    %c0_i32_0 = arith.constant 0 : i32
    %c0_i32_1 = arith.constant 0 : i32
    return %c0_i32, %c0_i32_0 : i32, i32
  }
  func.func @transform_5(%arg0: i32) -> (i32, i32) {
    %c0_i32 = arith.constant 0 : i32
    %c0_i32_0 = arith.constant 0 : i32
    %c0_i32_1 = arith.constant 0 : i32
    return %c0_i32, %c0_i32_0 : i32, i32
  }
  func.func @transform_6(%arg0: i32) -> (i32, i32) {
    %c0_i32 = arith.constant 0 : i32
    %c0_i32_0 = arith.constant 0 : i32
    %c0_i32_1 = arith.constant 0 : i32
    return %c0_i32, %c0_i32_0 : i32, i32
  }
  func.func @transform_7(%arg0: i32) -> (i32, i32) {
    %c0_i32 = arith.constant 0 : i32
    %c0_i32_0 = arith.constant 0 : i32
    %c0_i32_1 = arith.constant 0 : i32
    return %c0_i32, %c0_i32_0 : i32, i32
  }
  func.func @transform_8(%arg0: i32) -> (i32, i32) {
    %c0_i32 = arith.constant 0 : i32
    %c0_i32_0 = arith.constant 0 : i32
    %c0_i32_1 = arith.constant 0 : i32
    return %c0_i32, %c0_i32_0 : i32, i32
  }
  func.func @transform_9(%arg0: i32) -> (i32, i32) {
    %c0_i32 = arith.constant 0 : i32
    %c0_i32_0 = arith.constant 0 : i32
    %c0_i32_1 = arith.constant 0 : i32
    return %c0_i32, %c0_i32_0 : i32, i32
  }
  func.func @transform_10(%arg0: i32) -> (i32, i32) {
    %c0_i32 = arith.constant 0 : i32
    %c0_i32_0 = arith.constant 0 : i32
    %c0_i32_1 = arith.constant 0 : i32
    return %c0_i32, %c0_i32_0 : i32, i32
  }
  func.func @transform_11(%arg0: i32) -> (i32, i32, i32) {
    %c0_i32 = arith.constant 0 : i32
    %c0_i32_0 = arith.constant 0 : i32
    %c0_i32_1 = arith.constant 0 : i32
    return %arg0, %c0_i32, %c0_i32_0 : i32, i32, i32
  }
}

module attributes {stable_mosaic.version = 11 : i64} {
  func.func @_layer_kernel(%arg0: i32, %arg1: memref<1x48x256xf32, #tpu.memory_space<vmem>>, %arg2: memref<8x48xf32, #tpu.memory_space<vmem>>, %arg3: memref<8x1xf32, #tpu.memory_space<vmem>>, %arg4: memref<1x8x256xf32, #tpu.memory_space<vmem>>) attributes {dimension_semantics = [#tpu.dimension_semantics<parallel>], iteration_bounds = array<i64: 2>, scalar_prefetch = 0 : i64, scratch_operands = 0 : i64, tpu.core_type = #tpu.core_type<tc>, window_params = [{transform_indices = @transform_0, window_bounds = array<i64: 1, 48, 256>}, {pipeline_mode = #tpu.pipeline_mode<synchronous>, transform_indices = @transform_1, window_bounds = array<i64: 8, 48>}, {pipeline_mode = #tpu.pipeline_mode<synchronous>, transform_indices = @transform_2, window_bounds = array<i64: 8, 1>}, {transform_indices = @transform_3, window_bounds = array<i64: 1, 8, 256>}]} {
    %c0 = arith.constant 0 : index
    %c0_0 = arith.constant 0 : index
    %c0_1 = arith.constant 0 : index
    %0 = vector.load %arg1[%c0, %c0_0, %c0_1] : memref<1x48x256xf32, #tpu.memory_space<vmem>>, vector<1x48x256xf32>
    %1 = vector.shape_cast %0 : vector<1x48x256xf32> to vector<48x256xf32>
    %c0_2 = arith.constant 0 : index
    %c0_3 = arith.constant 0 : index
    %2 = vector.load %arg2[%c0_2, %c0_3] : memref<8x48xf32, #tpu.memory_space<vmem>>, vector<8x48xf32>
    %cst = arith.constant dense<0.000000e+00> : vector<8x256xf32>
    %3 = tpu.matmul %2, %1, %cst {dimension_numbers = #tpu.dot_dimension_numbers<[1], [0], [0], [1], [0, 0, 1, 1], [], []>} : vector<8x48xf32>, vector<48x256xf32>, vector<8x256xf32> -> vector<8x256xf32>
    %c0_4 = arith.constant 0 : index
    %c0_5 = arith.constant 0 : index
    %4 = vector.load %arg3[%c0_4, %c0_5] : memref<8x1xf32, #tpu.memory_space<vmem>>, vector<8x1xf32>
    %5 = vector.broadcast %4 : vector<8x1xf32> to vector<8x256xf32>
    %6 = arith.addf %3, %5 : vector<8x256xf32>
    %cst_6 = arith.constant 2.000000e-01 : f32
    %7 = vector.broadcast %cst_6 : f32 to vector<8x256xf32>
    %8 = arith.mulf %7, %6 : vector<8x256xf32>
    %9 = arith.maximumf %6, %8 : vector<8x256xf32>
    %c0_7 = arith.constant 0 : index
    %c0_8 = arith.constant 0 : index
    %c0_9 = arith.constant 0 : index
    %10 = vector.load %arg4[%c0_7, %c0_8, %c0_9] : memref<1x8x256xf32, #tpu.memory_space<vmem>>, vector<1x8x256xf32>
    %11 = vector.shape_cast %10 : vector<1x8x256xf32> to vector<8x256xf32>
    %12 = vector.shape_cast %9 : vector<8x256xf32> to vector<1x8x256xf32>
    tpu.vector_store %arg4[%c0_7, %c0_8, %c0_9], %12 {strides = array<i32>} : memref<1x8x256xf32, #tpu.memory_space<vmem>>, vector<1x8x256xf32>,
    return
  }
  func.func @transform_0(%arg0: i32) -> (i32, i32, i32) {
    %c0_i32 = arith.constant 0 : i32
    %c0_i32_0 = arith.constant 0 : i32
    %c0_i32_1 = arith.constant 0 : i32
    return %arg0, %c0_i32, %c0_i32_0 : i32, i32, i32
  }
  func.func @transform_1(%arg0: i32) -> (i32, i32) {
    %c0_i32 = arith.constant 0 : i32
    %c0_i32_0 = arith.constant 0 : i32
    %c0_i32_1 = arith.constant 0 : i32
    return %c0_i32, %c0_i32_0 : i32, i32
  }
  func.func @transform_2(%arg0: i32) -> (i32, i32) {
    %c0_i32 = arith.constant 0 : i32
    %c0_i32_0 = arith.constant 0 : i32
    %c0_i32_1 = arith.constant 0 : i32
    return %c0_i32, %c0_i32_0 : i32, i32
  }
  func.func @transform_3(%arg0: i32) -> (i32, i32, i32) {
    %c0_i32 = arith.constant 0 : i32
    %c0_i32_0 = arith.constant 0 : i32
    %c0_i32_1 = arith.constant 0 : i32
    return %arg0, %c0_i32, %c0_i32_0 : i32, i32, i32
  }
}

</mosaic_0001>

<llo_original>
// kernel: tpu_custom_call.1
$region0: #{tpu_custom_call.1}
  #allocation0 [shape = 'u32[]', space=smem, size = 0x4, offset = 0x4, fixed_abs, tag = 'smem constant byte address 0x4 - core index']
  #allocation1 [shape = 'u32[72,128]{1,0:T(1,128)}', space=vmem, size = 0x9000, scoped, tag = 'internal scratch']
  %s0 = inlined_call_operand.hbm [shape: f32[2,48,256], index: 0, kind: input, shape index: {}]
  %s1 = inlined_call_operand.vmem [shape: f32[8,48], index: 1, kind: input, shape index: {}]
  %s2 = inlined_call_operand.vmem [shape: f32[8,1], index: 2, kind: input, shape index: {}]
  %s3 = inlined_call_operand.hbm [shape: f32[2,8,256], index: 3, kind: output, shape index: {}]
  %s4 = sld [smem:[#allocation0]]
  $region49: #{tpu_custom_call.1} parent=0
    _
  %s6 = ssub.s32 1, %s4
  %s7 = scalar_select 0, %s6, %s4
  $region1: #{tpu_custom_call.1} parent=0
    #allocation2 [shape = 'u8[98304]{0}', space=vmem, size = 0x18000, scoped, tag = 'input window, operand 0']
    #allocation3 [shape = 's32[2]{0}', space=sflag, size = 0x8, scoped, tag = 'scoped memory for tpu_custom_call.1']
    #allocation4 [shape = 's32[2]{0}', space=sflag, size = 0x8, scoped, tag = 'scoped memory for tpu_custom_call.1']
    #allocation5 [shape = 'u8[16384]{0}', space=vmem, size = 0x4000, scoped, tag = 'output window, operand 0']
    %8 = vsyncpa [#allocation3], 0
    %s9 = scalar_lea.sflag [#allocation3], 1
    %10 = vsyncpa %s9, 0
    %11 = vsyncpa [#allocation4], 0
    %s12 = scalar_lea.sflag [#allocation4], 1
    %13 = vsyncpa %s12, 0
    loop: start=0, step=1, limit=4
    $region2: #{tpu_custom_call.1} parent=1 // loop_pre_header
      _
    $region3: #{tpu_custom_call.1} parent=1 // loop_header
      %s15 = sphi 0, %s19
      %p16 = scmp.ge.s32.totalorder %s15, 4
      %s25 = sphi 0, %s27
      %s28 = sphi 0, %s25
      %s29 = sphi 0, %s28
      %s45 = sphi 0, %s29
      %s49 = sphi 0, %s49
      %s51 = sphi 0, %s49
      %s52 = sphi 0, %s51
      %s66 = sphi 0, %s52
      %s70 = sphi 0, %s70
      %s72 = sphi 0, %s70
      %s73 = sphi 0, %s72
      %s87 = sphi 0, %s73
      %s93 = sphi 0, %s95
      %s96 = sphi 0, %s93
      %s97 = sphi 0, %s96
      %s113 = sphi 0, %s97
    $region4: #{tpu_custom_call.1} parent=1 // loop_header_branch
      %18 = sbr.rel (%p16) target = $region8
    $region5: #{tpu_custom_call.1} parent=1 // loop_body
      %s20 = ssub.s32 %s15, 1
      %s21 = ssub.s32 %s15, 2
      %s22 = sadd.s32 %s15, 1
      %s23 = ssub.s32 %s15, %s22
      %p24 = scmp.eq.s32.totalorder %s23, 0
      %s26 = sadd.s32 %s25, 1
      %s27 = scalar_select %p24, %s25, %s26
      %p30 = pneg %p24
      %p31 = scmp.eq.s32.totalorder %s15, 1
      %p32 = por %p30, %p31
      %p33 = scmp.ne.s32.totalorder %s25, %s28
      %p34 = scmp.eq.s32.totalorder %s15, 0
      %p35 = por %p33, %p34
      %p36 = scmp.ne.s32.totalorder %s25, %s28
      %p37 = scmp.eq.s32.totalorder %s20, 1
      %p38 = por %p36, %p37
      %p39 = scmp.ne.s32.totalorder %s28, %s29
      %p40 = scmp.eq.s32.totalorder %s20, 0
      %p41 = por %p39, %p40
      %p42 = scmp.ne.s32.totalorder %s28, %s29
      %p43 = scmp.eq.s32.totalorder %s21, 1
      %p44 = por %p42, %p43
      %p46 = scmp.ne.s32.totalorder %s29, %s45
      %p47 = scmp.eq.s32.totalorder %s21, 0
      %p48 = por %p46, %p47
      %s50 = sadd.s32 %s49, 1
      %p53 = scmp.eq.s32.totalorder %s15, 1
      %p54 = scmp.ne.s32.totalorder %s49, %s51
      %p55 = scmp.eq.s32.totalorder %s15, 0
      %p56 = por %p54, %p55
      %p57 = scmp.ne.s32.totalorder %s49, %s51
      %p58 = scmp.eq.s32.totalorder %s20, 1
      %p59 = por %p57, %p58
      %p60 = scmp.ne.s32.totalorder %s51, %s52
      %p61 = scmp.eq.s32.totalorder %s20, 0
      %p62 = por %p60, %p61
      %p63 = scmp.ne.s32.totalorder %s51, %s52
      %p64 = scmp.eq.s32.totalorder %s21, 1
      %p65 = por %p63, %p64
      %p67 = scmp.ne.s32.totalorder %s52, %s66
      %p68 = scmp.eq.s32.totalorder %s21, 0
      %p69 = por %p67, %p68
      %s71 = sadd.s32 %s70, 1
      %p74 = scmp.eq.s32.totalorder %s15, 1
      %p75 = scmp.ne.s32.totalorder %s70, %s72
      %p76 = scmp.eq.s32.totalorder %s15, 0
      %p77 = por %p75, %p76
      %p78 = scmp.ne.s32.totalorder %s70, %s72
      %p79 = scmp.eq.s32.totalorder %s20, 1
      %p80 = por %p78, %p79
      %p81 = scmp.ne.s32.totalorder %s72, %s73
      %p82 = scmp.eq.s32.totalorder %s20, 0
      %p83 = por %p81, %p82
      %p84 = scmp.ne.s32.totalorder %s72, %s73
      %p85 = scmp.eq.s32.totalorder %s21, 1
      %p86 = por %p84, %p85
      %p88 = scmp.ne.s32.totalorder %s73, %s87
      %p89 = scmp.eq.s32.totalorder %s21, 0
      %p90 = por %p88, %p89
      %s91 = ssub.s32 %s15, %s22
      %p92 = scmp.eq.s32.totalorder %s91, 0
      %s94 = sadd.s32 %s93, 1
      %s95 = scalar_select %p92, %s93, %s94
      %p98 = pneg %p92
      %p99 = scmp.eq.s32.totalorder %s15, 1
      %p100 = por %p98, %p99
      %p101 = scmp.ne.s32.totalorder %s93, %s96
      %p102 = scmp.eq.s32.totalorder %s15, 0
      %p103 = por %p101, %p102
      %p104 = scmp.ne.s32.totalorder %s93, %s96
      %p105 = scmp.eq.s32.totalorder %s20, 1
      %p106 = por %p104, %p105
      %p107 = scmp.ne.s32.totalorder %s96, %s97
      %p108 = scmp.eq.s32.totalorder %s20, 0
      %p109 = por %p107, %p108
      %p110 = scmp.ne.s32.totalorder %s96, %s97
      %p111 = scmp.eq.s32.totalorder %s21, 1
      %p112 = por %p110, %p111
      %p114 = scmp.ne.s32.totalorder %s97, %s113
      %p115 = scmp.eq.s32.totalorder %s21, 0
      %p116 = por %p114, %p115
      %p117 = scmp.le.s32.totalorder 1, %s15
      %p118 = scmp.lt.s32.totalorder %s15, 3
      %p119 = pnand %p117, %p118
      %p120 = pneg %p119
      // Predicated region
      $region9: #{tpu_custom_call.1} parent=5 // pred_check
        _
      $region10: #{tpu_custom_call.1} parent=5 // pred_check_branch
        %122 = sbr.rel (%p119) target = $region12
      $region11: #{tpu_custom_call.1} parent=5 // pred_region
        %s123 = ssub.s32 %s15, 1
        // Predicated region
        $region13: #{tpu_custom_call.1} parent=11 // pred_check
          %p124 = pneg %p62
        $region14: #{tpu_custom_call.1} parent=11 // pred_check_branch
          %126 = sbr.rel (%p124) target = $region16
        $region15: #{tpu_custom_call.1} parent=11 // pred_region
          _
        $region16: #{tpu_custom_call.1} parent=11 // pred_fallthru
          _
        // Predicated region
        $region17: #{tpu_custom_call.1} parent=11 // pred_check
          %p127 = pneg %p83
        $region18: #{tpu_custom_call.1} parent=11 // pred_check_branch
          %129 = sbr.rel (%p127) target = $region20
        $region19: #{tpu_custom_call.1} parent=11 // pred_region
          _
        $region20: #{tpu_custom_call.1} parent=11 // pred_fallthru
          _
      $region12: #{tpu_custom_call.1} parent=5 // pred_fallthru
        _
      %p130 = scmp.lt.s32.totalorder %s15, 2
      // Predicated region
      $region21: #{tpu_custom_call.1} parent=5 // pred_check
        %p131 = pneg %p130
      $region22: #{tpu_custom_call.1} parent=5 // pred_check_branch
        %133 = sbr.rel (%p131) target = $region24
      $region23: #{tpu_custom_call.1} parent=5 // pred_region
        // Predicated region
        $region25: #{tpu_custom_call.1} parent=23 // pred_check
          %p134 = pneg %p35
        $region26: #{tpu_custom_call.1} parent=23 // pred_check_branch
          %136 = sbr.rel (%p134) target = $region28
        $region27: #{tpu_custom_call.1} parent=23 // pred_region
          %s137 = sand.u32 %s25, 1
          %s138 = scalar_lea.sflag [#allocation3], %s137
          %s139 = sand.u32 %s25, 1
          %s140 = smul.addr %s139, 96
          %s141 = scalar_lea.vmem [#allocation2], %s140
          %143 = vsyncadd %s138, 0
          %s144 = smul.addr %s15, 12
          %s145 = smul.addr %s144, 8
          %s146 = scalar_lea.hbm %s0, %s145
          %s147 = sshll.u32 %s146, 4
          %s148 = int_to_ptr.hbm [resolvable:$true] %s147
          %s149 = sshll.u32 %s141, 4
          %s150 = int_to_ptr.vmem [resolvable:$true] %s149
          %155 = dma.hbm_to_vmem [thread:$0]  %s148, 1536, %s150, %s138, 256, 256, 16
        $region28: #{tpu_custom_call.1} parent=23 // pred_fallthru
          _
      $region24: #{tpu_custom_call.1} parent=5 // pred_fallthru
        _
      %p156 = scmp.le.s32.totalorder 1, %s15
      %p157 = scmp.lt.s32.totalorder %s15, 3
      %p158 = pnand %p156, %p157
      %p159 = pneg %p158
      // Predicated region
      $region29: #{tpu_custom_call.1} parent=5 // pred_check
        _
      $region30: #{tpu_custom_call.1} parent=5 // pred_check_branch
        %161 = sbr.rel (%p158) target = $region32
      $region31: #{tpu_custom_call.1} parent=5 // pred_region
        %s162 = ssub.s32 %s15, 1
        %s163 = sand.u32 %s28, 1
        %s164 = scalar_lea.sflag [#allocation3], %s163
        %s165 = sand.u32 %s28, 1
        %s166 = smul.addr %s165, 96
        %s167 = scalar_lea.vmem [#allocation2], %s166
        // Predicated region
        $region33: #{tpu_custom_call.1} parent=31 // pred_check
          %p168 = pneg %p41
        $region34: #{tpu_custom_call.1} parent=31 // pred_check_branch
          %170 = sbr.rel (%p168) target = $region36
        $region35: #{tpu_custom_call.1} parent=31 // pred_region
          %172 = dma.done %s164, 1536
        $region36: #{tpu_custom_call.1} parent=31 // pred_fallthru
          _
        %s173 = sand.u32 %s28, 1
        %s174 = scalar_lea.sflag [#allocation3], %s173
        %s175 = sand.u32 %s28, 1
        %s176 = smul.addr %s175, 96
        %s177 = scalar_lea.vmem [#allocation2], %s176
        %p178 = pneg %p41
        %p179 = pneg %p38
        %p180 = pneg %p62
        %p181 = pneg %p59
        %p182 = pneg %p83
        %p183 = pneg %p80
        %p184 = pneg %p109
        %p185 = pneg %p106
        %s186 = sand.u32 %s96, 1
        %s187 = scalar_lea.sflag [#allocation4], %s186
        %s188 = sand.u32 %s96, 1
        %s189 = smul.addr %s188, 16
        %s190 = scalar_lea.vmem [#allocation5], %s189
        %v191 = vld [vmem:[%s167] sm:$0xff]
        %v192 = vld [vmem:[%s167 + $0x8] sm:$0xff]
        %v193 = vld [vmem:[%s167 + $0x10] sm:$0xff]
        %v194 = vld [vmem:[%s167 + $0x18] sm:$0xff]
        %v195 = vld [vmem:[%s167 + $0x20] sm:$0xff]
        %v196 = vld [vmem:[%s167 + $0x28] sm:$0xff]
        %v197 = vld [vmem:[%s167 + $0x30] sm:$0xff]
        %v198 = vld [vmem:[%s167 + $0x38] sm:$0xff]
        %v199 = vld [vmem:[%s167 + $0x40] sm:$0xff]
        %v200 = vld [vmem:[%s167 + $0x48] sm:$0xff]
        %v201 = vld [vmem:[%s167 + $0x50] sm:$0xff]
        %v202 = vld [vmem:[%s167 + $0x58] sm:$0xff]
        %v203 = vld [vmem:[%s1] sm:$0xff]
        %v204 = vld [vmem:[%s2] sm:$0xff]
        %206 = vset.pattern.permute.xlu0 0
        %207 = vperm.xlu0 %206, %v204
        %v208 = vpop.permute.xlu0 %207
        %vm210 = vcmask 392192
        %v212 = vsel %vm210, %v203, 0
        %214 = vmatpush.msra.mxu0 0.0
        %215 = vmatpush.msra.mxu0 0.0
        %216 = vmatpush.msra.mxu0 0.0
        %217 = vmatpush.msra.mxu0 0.0
        %218 = vmatpush.msra.mxu0 0.0
        %219 = vmatpush.msra.mxu0 0.0
        %220 = vmatpush.msra.mxu0 0.0
        %221 = vmatpush.msra.mxu0 0.0
        %222 = vmatpush.msra.mxu0 0.0
        %223 = vmatpush.msra.mxu0 0.0
        %224 = vmatpush.msra.mxu0 %v201
        %225 = vmatpush.msra.mxu0 %v199
        %226 = vmatpush.msra.mxu0 %v197
        %227 = vmatpush.msra.mxu0 %v195
        %228 = vmatpush.msra.mxu0 %v193
        %229 = vmatpush.msra.mxu0 %v191
        %230 = vmatmul.f32.gmra.mxu0 %v212
        %v231 = vpop.f32.mrf.mxu0
        %v232 = vadd.f32 %v208, %v231
        %233 = vdwg.mxu0
        %234 = vmatpush.msra.mxu0 0.0
        %235 = vmatpush.msra.mxu0 0.0
        %236 = vmatpush.msra.mxu0 0.0
        %237 = vmatpush.msra.mxu0 0.0
        %238 = vmatpush.msra.mxu0 0.0
        %239 = vmatpush.msra.mxu0 0.0
        %240 = vmatpush.msra.mxu0 0.0
        %241 = vmatpush.msra.mxu0 0.0
        %242 = vmatpush.msra.mxu0 0.0
        %243 = vmatpush.msra.mxu0 0.0
        %244 = vmatpush.msra.mxu0 %v202
        %245 = vmatpush.msra.mxu0 %v200
        %246 = vmatpush.msra.mxu0 %v198
        %247 = vmatpush.msra.mxu0 %v196
        %248 = vmatpush.msra.mxu0 %v194
        %249 = vmatpush.msra.mxu0 %v192
        %250 = vmatmul.f32.gmra.mxu0 %v212
        %v251 = vpop.f32.mrf.mxu0
        %v252 = vadd.f32 %v208, %v251
        %253 = vdwg.mxu0
        %v254 = vmul.f32 %v232, 0.2
        %v255 = vmul.f32 %v252, 0.2
        %v256 = vmax.f32 %v232, %v254
        %v257 = vmax.f32 %v252, %v255
        %258 = vst [vmem:[%s190] sm:$0xff] %v256
        %259 = vst [vmem:[%s190 + $0x8] sm:$0xff] %v257
        %s260 = sand.u32 %s96, 1
        %s261 = scalar_lea.sflag [#allocation4], %s260
        %s262 = sand.u32 %s96, 1
        %s263 = smul.addr %s262, 16
        %s264 = scalar_lea.vmem [#allocation5], %s263
        // Predicated region
        $region37: #{tpu_custom_call.1} parent=31 // pred_check
          %p265 = pneg %p106
        $region38: #{tpu_custom_call.1} parent=31 // pred_check_branch
          %267 = sbr.rel (%p265) target = $region40
        $region39: #{tpu_custom_call.1} parent=31 // pred_region
          %269 = vsyncadd %s261, 0
          %s270 = smul.addr %s20, 2
          %s271 = smul.addr %s270, 8
          %s272 = scalar_lea.hbm %s3, %s271
          %s274 = sshll.u32 %s264, 4
          %s275 = int_to_ptr.vmem [resolvable:$true] %s274
          %s276 = sshll.u32 %s272, 4
          %s277 = int_to_ptr.hbm [resolvable:$true] %s276
          %279 = dma.vmem_to_hbm [thread:$0]  %s275, 256, %s277, %s261
        $region40: #{tpu_custom_call.1} parent=31 // pred_fallthru
          _
      $region32: #{tpu_custom_call.1} parent=5 // pred_fallthru
        _
      %p280 = scmp.le.s32.totalorder 2, %s15
      // Predicated region
      $region41: #{tpu_custom_call.1} parent=5 // pred_check
        %p281 = pneg %p280
      $region42: #{tpu_custom_call.1} parent=5 // pred_check_branch
        %283 = sbr.rel (%p281) target = $region44
      $region43: #{tpu_custom_call.1} parent=5 // pred_region
        %s284 = ssub.s32 %s15, 2
        // Predicated region
        $region45: #{tpu_custom_call.1} parent=43 // pred_check
          %p285 = pneg %p112
        $region46: #{tpu_custom_call.1} parent=43 // pred_check_branch
          %287 = sbr.rel (%p285) target = $region48
        $region47: #{tpu_custom_call.1} parent=43 // pred_region
          %s288 = sand.u32 %s97, 1
          %s289 = scalar_lea.sflag [#allocation4], %s288
          %s290 = sand.u32 %s97, 1
          %s291 = smul.addr %s290, 16
          %s292 = scalar_lea.vmem [#allocation5], %s291
          %294 = dma.done %s289, 256
        $region48: #{tpu_custom_call.1} parent=43 // pred_fallthru
          _
      $region44: #{tpu_custom_call.1} parent=5 // pred_fallthru
        _
    $region6: #{tpu_custom_call.1} parent=1 // loop_footer
      %s19 = sadd.s32 1, %s15
    $region7: #{tpu_custom_call.1} parent=1 // loop_footer_branch
      %14 = sbr.rel target = $region3
    $region8: #{tpu_custom_call.1} parent=1 // loop_exit
      _
    %295 = vsyncpa [#allocation3], 1
    %s296 = scalar_lea.sflag [#allocation3], 1
    %297 = vsyncpa %s296, 1
    %298 = vsyncpa [#allocation4], 1
    %s299 = scalar_lea.sflag [#allocation4], 1
    %300 = vsyncpa %s299, 1

</llo_original>
